<compile_context>
chip_gen: v6e
topology: v6e:2x2x1
jax: 0.10.0
libtpu: 0.0.40
codegen_flags: <defaults>
</compile_context>

<pallas_src>
import functools
import math

import jax
import jax.numpy as jnp
from jax import lax
from jax.experimental import pallas as pl
from jax.experimental.pallas import tpu as pltpu

LN_EPS = 1e-5  # nn.LayerNorm default


def _transformer_block_kernel(heads,
                              x_q_ref, x_kv_ref,
                              wq_ref, wk_ref, wv_ref,
                              wo_ref, bo_ref,
                              g1_ref, be1_ref,
                              w1_ref, bf1_ref,
                              w2_ref, bf2_ref,
                              g2_ref, be2_ref,
                              o_ref):
    """One TransformerBlock for (one batch element, one query tile)."""
    h = heads
    x_q = x_q_ref[0].astype(jnp.float32)        # (tq, E) query-tile activations
    x_kv = x_kv_ref[0].astype(jnp.float32)      # (T,  E) full sequence
    tq, e = x_q.shape
    t_kv = x_kv.shape[0]
    s = e // h
    scale = 1.0 / math.sqrt(s)                  # default scalefactor in former.SelfAttention
    q_off = pl.program_id(1) * tq               # global row offset of this query tile

    xq_b = x_q.astype(jnp.bfloat16)
    xkv_b = x_kv.astype(jnp.bfloat16)

    # --- full-width projections: contraction K = E, output N = E (MXU friendly)
    q = jnp.dot(xq_b, wq_ref[...], preferred_element_type=jnp.float32) * scale  # (tq, E)
    k = jnp.dot(xkv_b, wk_ref[...], preferred_element_type=jnp.float32)         # (T,  E)
    v = jnp.dot(xkv_b, wv_ref[...], preferred_element_type=jnp.float32)         # (T,  E)

    # --- split heads (contiguous feature slices, matching view(b,t,h,s)) and batch them
    qh = jnp.stack([q[:, i * s:(i + 1) * s] for i in range(h)], axis=0).astype(jnp.bfloat16)  # (h, tq, s)
    kh = jnp.stack([k[:, i * s:(i + 1) * s] for i in range(h)], axis=0).astype(jnp.bfloat16)  # (h, T,  s)
    vh = jnp.stack([v[:, i * s:(i + 1) * s] for i in range(h)], axis=0).astype(jnp.bfloat16)  # (h, T,  s)

    sc = jnp.einsum('hqd,hkd->hqk', qh, kh,
                    preferred_element_type=jnp.float32)              # (h, tq, T)

    # causal mask: mask_(..., mask_diagonal=False) -> block col > row
    row = q_off + lax.broadcasted_iota(jnp.int32, (tq, t_kv), 0)
    col = lax.broadcasted_iota(jnp.int32, (tq, t_kv), 1)
    sc = jnp.where((col > row)[None, :, :], -jnp.inf, sc)

    # softmax(dim=-1), divide -> EUP reciprocal
    m = jnp.max(sc, axis=-1, keepdims=True)
    p = jnp.exp(sc - m)
    p = p * pl.reciprocal(jnp.sum(p, axis=-1, keepdims=True), approx=True)

    att = jnp.einsum('hqk,hkd->hqd', p.astype(jnp.bfloat16), vh,
                     preferred_element_type=jnp.float32)             # (h, tq, s)
    att = jnp.concatenate([att[i] for i in range(h)], axis=-1)       # (tq, E)  == unifyheads concat

    out = jnp.dot(att.astype(jnp.bfloat16), wo_ref[...],
                  preferred_element_type=jnp.float32) + bo_ref[0]    # single (E,E) output proj

    # --- residual + LayerNorm 1 (f32)
    y = out + x_q
    mu = jnp.mean(y, axis=-1, keepdims=True)
    var = jnp.mean((y - mu) ** 2, axis=-1, keepdims=True)
    y = (y - mu) * lax.rsqrt(var + LN_EPS) * g1_ref[0] + be1_ref[0]

    # --- feed-forward: Linear(e, 4e) -> ReLU -> Linear(4e, e)  (bf16 matmuls)
    ff = jnp.dot(y.astype(jnp.bfloat16), w1_ref[...],
                 preferred_element_type=jnp.float32) + bf1_ref[0]
    ff = jnp.maximum(ff, 0.0)
    ff = jnp.dot(ff.astype(jnp.bfloat16), w2_ref[...],
                 preferred_element_type=jnp.float32) + bf2_ref[0]

    # --- residual + LayerNorm 2 (dropout p=0.0 -> identity)
    z = ff + y
    mu2 = jnp.mean(z, axis=-1, keepdims=True)
    var2 = jnp.mean((z - mu2) ** 2, axis=-1, keepdims=True)
    z = (z - mu2) * lax.rsqrt(var2 + LN_EPS) * g2_ref[0] + be2_ref[0]

    o_ref[0] = z.astype(o_ref.dtype)


def _output_head_kernel(x_ref, w_ref, b_ref, o_ref):
    """toprobs Linear + log_softmax(dim=2) for one (batch, seq-tile)."""
    x = x_ref[0].astype(jnp.float32)                                  # (tq, E)
    logits = jnp.dot(x.astype(jnp.bfloat16), w_ref[...],
                     preferred_element_type=jnp.float32) + b_ref[0]   # (tq, V)
    m = jnp.max(logits, axis=-1, keepdims=True)
    shifted = logits - m
    lse = jnp.log(jnp.sum(jnp.exp(shifted), axis=-1, keepdims=True))
    o_ref[0] = (shifted - lse).astype(o_ref.dtype)


def _full_spec(shape):
    # whole (untiled) array, re-used for every grid step (grid-invariant -> not re-DMA'd)
    nd = len(shape)
    return pl.BlockSpec(shape, lambda i, j, _n=nd: (0,) * _n)


def _choose_tq(t):
    # largest multiple-of-8 tile that still gives >= 2 sequence tiles
    for cand in (256, 128, 64, 32, 16, 8):
        if t % cand == 0 and t // cand >= 2:
            return cand
    return t


def transformer_block(x, p, heads, tq):
    b, t, e = x.shape
    hidden = p["w1"].shape[1]
    grid = (b, t // tq)

    in_specs = [
        pl.BlockSpec((1, tq, e), lambda i, j: (i, j, 0)),   # x (query tile)
        pl.BlockSpec((1, t, e), lambda i, j: (i, 0, 0)),    # x (full seq for K/V)
        _full_spec((e, e)), _full_spec((e, e)), _full_spec((e, e)),   # Wq Wk Wv
        _full_spec((e, e)), _full_spec((1, e)),                       # Wo, bo
        _full_spec((1, e)), _full_spec((1, e)),                       # LN1 gamma/beta
        _full_spec((e, hidden)), _full_spec((1, hidden)),             # FF W1, b1
        _full_spec((hidden, e)), _full_spec((1, e)),                  # FF W2, b2
        _full_spec((1, e)), _full_spec((1, e)),                       # LN2 gamma/beta
    ]
    return pl.pallas_call(
        functools.partial(_transformer_block_kernel, heads),
        out_shape=jax.ShapeDtypeStruct((b, t, e), x.dtype),
        grid=grid,
        in_specs=in_specs,
        out_specs=pl.BlockSpec((1, tq, e), lambda i, j: (i, j, 0)),
        compiler_params=pltpu.CompilerParams(
            dimension_semantics=("parallel", "parallel")),
    )(x, x, p["wq"], p["wk"], p["wv"], p["wo"], p["bo"],
      p["g1"], p["be1"], p["w1"], p["bf1"], p["w2"], p["bf2"],
      p["g2"], p["be2"])


def output_head(x, wp, bp, tq):
    b, t, e = x.shape
    num_tokens = wp.shape[1]
    grid = (b, t // tq)
    return pl.pallas_call(
        _output_head_kernel,
        out_shape=jax.ShapeDtypeStruct((b, t, num_tokens), x.dtype),
        grid=grid,
        in_specs=[
            pl.BlockSpec((1, tq, e), lambda i, j: (i, j, 0)),
            _full_spec((e, num_tokens)),
            _full_spec((1, num_tokens)),
        ],
        out_specs=pl.BlockSpec((1, tq, num_tokens), lambda i, j: (i, j, 0)),
        compiler_params=pltpu.CompilerParams(
            dimension_semantics=("parallel", "parallel")),
    )(x, wp, bp)


def init_params(key, emb, heads, depth, seq_length, num_tokens, ff_mult=4):
    keys = jax.random.split(key, 3 + depth)

    def w(k, shape):  # bf16 matmul weights
        return (0.02 * jax.random.normal(k, shape, jnp.float32)).astype(jnp.bfloat16)

    params = {
        "tok_emb": 0.02 * jax.random.normal(keys[0], (num_tokens, emb), jnp.float32),
        "pos_emb": 0.02 * jax.random.normal(keys[1], (seq_length, emb), jnp.float32),
        "wp": w(keys[2], (emb, num_tokens)),
        "bp": jnp.zeros((1, num_tokens), jnp.float32),
        "blocks": [],
    }
    hidden = ff_mult * emb
    for d in range(depth):
        bk = jax.random.split(keys[3 + d], 6)
        params["blocks"].append(dict(
            wq=w(bk[0], (emb, emb)),
            wk=w(bk[1], (emb, emb)),
            wv=w(bk[2], (emb, emb)),
            wo=w(bk[3], (emb, emb)),
            bo=jnp.zeros((1, emb), jnp.float32),
            g1=jnp.ones((1, emb), jnp.float32),
            be1=jnp.zeros((1, emb), jnp.float32),
            w1=w(bk[4], (emb, hidden)),
            bf1=jnp.zeros((1, hidden), jnp.float32),
            w2=w(bk[5], (hidden, emb)),
            bf2=jnp.zeros((1, emb), jnp.float32),
            g2=jnp.ones((1, emb), jnp.float32),
            be2=jnp.zeros((1, emb), jnp.float32),
        ))
    return params


def gtransformer_forward(params, tokens_idx, heads):
    """tokens_idx: (B, T) int32 -> (B, T, num_tokens) log-probabilities."""
    b, t = tokens_idx.shape
    tq = _choose_tq(t)
    # Embedding lookups are tiny gathers; kept as plain-JAX glue.
    tok = jnp.take(params["tok_emb"], tokens_idx, axis=0)          # (B, T, E)
    pos = params["pos_emb"][:t][None, :, :]                        # (1, T, E)
    x = (tok + pos).astype(jnp.float32)
    for blk in params["blocks"]:
        x = transformer_block(x, blk, heads, tq)
    return output_head(x, params["wp"], params["bp"], tq)


if __name__ == "__main__":
    # Small, module-consistent, lane-dense shapes (E and vocab multiples of 128).
    EMB, HEADS, DEPTH, SEQ_LEN, NUM_TOKENS = 128, 4, 2, 16, 128
    BATCH = 2

    key = jax.random.PRNGKey(0)
    pkey, xkey = jax.random.split(key)
    params = init_params(pkey, EMB, HEADS, DEPTH, SEQ_LEN, NUM_TOKENS)
    x = jax.random.randint(xkey, (BATCH, SEQ_LEN), 0, NUM_TOKENS, dtype=jnp.int32)

    logprobs = gtransformer_forward(params, x, HEADS)
    logprobs = jax.block_until_ready(logprobs)

    assert logprobs.shape == (BATCH, SEQ_LEN, NUM_TOKENS)
    # log_softmax rows must exponentiate-sum to ~1
    sums = jnp.sum(jnp.exp(logprobs), axis=-1)
    assert bool(jnp.all(jnp.abs(sums - 1.0) < 1e-3))

    print("KERNEL_OK")
</pallas_src>

<mosaic_0001>
module attributes {stable_mosaic.version = 11 : i64} {
  func.func @_transformer_block_kernel(%arg0: i32, %arg1: i32, %arg2: memref<1x8x128xf32, #tpu.memory_space<vmem>>, %arg3: memref<1x16x128xf32, #tpu.memory_space<vmem>>, %arg4: memref<128x128xbf16, #tpu.memory_space<vmem>>, %arg5: memref<128x128xbf16, #tpu.memory_space<vmem>>, %arg6: memref<128x128xbf16, #tpu.memory_space<vmem>>, %arg7: memref<128x128xbf16, #tpu.memory_space<vmem>>, %arg8: memref<1x128xf32, #tpu.memory_space<vmem>>, %arg9: memref<1x128xf32, #tpu.memory_space<vmem>>, %arg10: memref<1x128xf32, #tpu.memory_space<vmem>>, %arg11: memref<128x512xbf16, #tpu.memory_space<vmem>>, %arg12: memref<1x512xf32, #tpu.memory_space<vmem>>, %arg13: memref<512x128xbf16, #tpu.memory_space<vmem>>, %arg14: memref<1x128xf32, #tpu.memory_space<vmem>>, %arg15: memref<1x128xf32, #tpu.memory_space<vmem>>, %arg16: memref<1x128xf32, #tpu.memory_space<vmem>>, %arg17: memref<1x8x128xf32, #tpu.memory_space<vmem>>) attributes {dimension_semantics = [#tpu.dimension_semantics<parallel>, #tpu.dimension_semantics<parallel>], iteration_bounds = array<i64: 2, 2>, scalar_prefetch = 0 : i64, scratch_operands = 0 : i64, tpu.core_type = #tpu.core_type<tc>, window_params = [{transform_indices = @transform_0, window_bounds = array<i64: 1, 8, 128>}, {transform_indices = @transform_1, window_bounds = array<i64: 1, 16, 128>}, {pipeline_mode = #tpu.pipeline_mode<synchronous>, transform_indices = @transform_2, window_bounds = array<i64: 128, 128>}, {pipeline_mode = #tpu.pipeline_mode<synchronous>, transform_indices = @transform_3, window_bounds = array<i64: 128, 128>}, {pipeline_mode = #tpu.pipeline_mode<synchronous>, transform_indices = @transform_4, window_bounds = array<i64: 128, 128>}, {pipeline_mode = #tpu.pipeline_mode<synchronous>, transform_indices = @transform_5, window_bounds = array<i64: 128, 128>}, {pipeline_mode = #tpu.pipeline_mode<synchronous>, transform_indices = @transform_6, window_bounds = array<i64: 1, 128>}, {pipeline_mode = #tpu.pipeline_mode<synchronous>, transform_indices = @transform_7, window_bounds = array<i64: 1, 128>}, {pipeline_mode = #tpu.pipeline_mode<synchronous>, transform_indices = @transform_8, window_bounds = array<i64: 1, 128>}, {pipeline_mode = #tpu.pipeline_mode<synchronous>, transform_indices = @transform_9, window_bounds = array<i64: 128, 512>}, {pipeline_mode = #tpu.pipeline_mode<synchronous>, transform_indices = @transform_10, window_bounds = array<i64: 1, 512>}, {pipeline_mode = #tpu.pipeline_mode<synchronous>, transform_indices = @transform_11, window_bounds = array<i64: 512, 128>}, {pipeline_mode = #tpu.pipeline_mode<synchronous>, transform_indices = @transform_12, window_bounds = array<i64: 1, 128>}, {pipeline_mode = #tpu.pipeline_mode<synchronous>, transform_indices = @transform_13, window_bounds = array<i64: 1, 128>}, {pipeline_mode = #tpu.pipeline_mode<synchronous>, transform_indices = @transform_14, window_bounds = array<i64: 1, 128>}, {transform_indices = @transform_15, window_bounds = array<i64: 1, 8, 128>}]} {
    %c0 = arith.constant 0 : index
    %c0_0 = arith.constant 0 : index
    %c0_1 = arith.constant 0 : index
    %0 = vector.load %arg2[%c0, %c0_0, %c0_1] : memref<1x8x128xf32, #tpu.memory_space<vmem>>, vector<1x8x128xf32>
    %1 = vector.shape_cast %0 : vector<1x8x128xf32> to vector<8x128xf32>
    %c0_2 = arith.constant 0 : index
    %c0_3 = arith.constant 0 : index
    %c0_4 = arith.constant 0 : index
    %2 = vector.load %arg3[%c0_2, %c0_3, %c0_4] : memref<1x16x128xf32, #tpu.memory_space<vmem>>, vector<1x16x128xf32>
    %3 = vector.shape_cast %2 : vector<1x16x128xf32> to vector<16x128xf32>
    %c8_i32 = arith.constant 8 : i32
    %4 = arith.muli %arg1, %c8_i32 : i32
    %5 = arith.truncf %1 : vector<8x128xf32> to vector<8x128xbf16>
    %6 = arith.truncf %3 : vector<16x128xf32> to vector<16x128xbf16>
    %c0_5 = arith.constant 0 : index
    %c0_6 = arith.constant 0 : index
    %7 = vector.load %arg4[%c0_5, %c0_6] : memref<128x128xbf16, #tpu.memory_space<vmem>>, vector<128x128xbf16>
    %cst = arith.constant dense<0.000000e+00> : vector<8x128xf32>
    %8 = tpu.matmul %5, %7, %cst {dimension_numbers = #tpu.dot_dimension_numbers<[1], [0], [0], [1], [0, 0, 1, 1], [], []>} : vector<8x128xbf16>, vector<128x128xbf16>, vector<8x128xf32> -> vector<8x128xf32>
    %cst_7 = arith.constant 0.176776692 : f32
    %9 = vector.broadcast %cst_7 : f32 to vector<8x128xf32>
    %10 = arith.mulf %8, %9 : vector<8x128xf32>
    %c0_8 = arith.constant 0 : index
    %c0_9 = arith.constant 0 : index
    %11 = vector.load %arg5[%c0_8, %c0_9] : memref<128x128xbf16, #tpu.memory_space<vmem>>, vector<128x128xbf16>
    %cst_10 = arith.constant dense<0.000000e+00> : vector<16x128xf32>
    %12 = tpu.matmul %6, %11, %cst_10 {dimension_numbers = #tpu.dot_dimension_numbers<[1], [0], [0], [1], [0, 0, 1, 1], [], []>} : vector<16x128xbf16>, vector<128x128xbf16>, vector<16x128xf32> -> vector<16x128xf32>
    %c0_11 = arith.constant 0 : index
    %c0_12 = arith.constant 0 : index
    %13 = vector.load %arg6[%c0_11, %c0_12] : memref<128x128xbf16, #tpu.memory_space<vmem>>, vector<128x128xbf16>
    %cst_13 = arith.constant dense<0.000000e+00> : vector<16x128xf32>
    %14 = tpu.matmul %6, %13, %cst_13 {dimension_numbers = #tpu.dot_dimension_numbers<[1], [0], [0], [1], [0, 0, 1, 1], [], []>} : vector<16x128xbf16>, vector<128x128xbf16>, vector<16x128xf32> -> vector<16x128xf32>
    %15 = vector.extract_strided_slice %10 {offsets = [0, 0], sizes = [8, 32], strides = [1, 1]} : vector<8x128xf32> to vector<8x32xf32>
    %16 = vector.extract_strided_slice %10 {offsets = [0, 32], sizes = [8, 32], strides = [1, 1]} : vector<8x128xf32> to vector<8x32xf32>
    %17 = vector.extract_strided_slice %10 {offsets = [0, 64], sizes = [8, 32], strides = [1, 1]} : vector<8x128xf32> to vector<8x32xf32>
    %18 = vector.extract_strided_slice %10 {offsets = [0, 96], sizes = [8, 32], strides = [1, 1]} : vector<8x128xf32> to vector<8x32xf32>
    %19 = vector.shape_cast %15 : vector<8x32xf32> to vector<1x8x32xf32>
    %20 = vector.shape_cast %16 : vector<8x32xf32> to vector<1x8x32xf32>
    %21 = vector.shape_cast %17 : vector<8x32xf32> to vector<1x8x32xf32>
    %22 = vector.shape_cast %18 : vector<8x32xf32> to vector<1x8x32xf32>
    %23 = tpu.concatenate %19, %20, %21, %22 in 0 : vector<1x8x32xf32>, vector<1x8x32xf32>, vector<1x8x32xf32>, vector<1x8x32xf32> -> vector<4x8x32xf32>
    %24 = arith.truncf %23 : vector<4x8x32xf32> to vector<4x8x32xbf16>
    %25 = vector.extract_strided_slice %12 {offsets = [0, 0], sizes = [16, 32], strides = [1, 1]} : vector<16x128xf32> to vector<16x32xf32>
    %26 = vector.extract_strided_slice %12 {offsets = [0, 32], sizes = [16, 32], strides = [1, 1]} : vector<16x128xf32> to vector<16x32xf32>
    %27 = vector.extract_strided_slice %12 {offsets = [0, 64], sizes = [16, 32], strides = [1, 1]} : vector<16x128xf32> to vector<16x32xf32>
    %28 = vector.extract_strided_slice %12 {offsets = [0, 96], sizes = [16, 32], strides = [1, 1]} : vector<16x128xf32> to vector<16x32xf32>
    %29 = vector.shape_cast %25 : vector<16x32xf32> to vector<1x16x32xf32>
    %30 = vector.shape_cast %26 : vector<16x32xf32> to vector<1x16x32xf32>
    %31 = vector.shape_cast %27 : vector<16x32xf32> to vector<1x16x32xf32>
    %32 = vector.shape_cast %28 : vector<16x32xf32> to vector<1x16x32xf32>
    %33 = tpu.concatenate %29, %30, %31, %32 in 0 : vector<1x16x32xf32>, vector<1x16x32xf32>, vector<1x16x32xf32>, vector<1x16x32xf32> -> vector<4x16x32xf32>
    %34 = arith.truncf %33 : vector<4x16x32xf32> to vector<4x16x32xbf16>
    %35 = vector.extract_strided_slice %14 {offsets = [0, 0], sizes = [16, 32], strides = [1, 1]} : vector<16x128xf32> to vector<16x32xf32>
    %36 = vector.extract_strided_slice %14 {offsets = [0, 32], sizes = [16, 32], strides = [1, 1]} : vector<16x128xf32> to vector<16x32xf32>
    %37 = vector.extract_strided_slice %14 {offsets = [0, 64], sizes = [16, 32], strides = [1, 1]} : vector<16x128xf32> to vector<16x32xf32>
    %38 = vector.extract_strided_slice %14 {offsets = [0, 96], sizes = [16, 32], strides = [1, 1]} : vector<16x128xf32> to vector<16x32xf32>
    %39 = vector.shape_cast %35 : vector<16x32xf32> to vector<1x16x32xf32>
    %40 = vector.shape_cast %36 : vector<16x32xf32> to vector<1x16x32xf32>
    %41 = vector.shape_cast %37 : vector<16x32xf32> to vector<1x16x32xf32>
    %42 = vector.shape_cast %38 : vector<16x32xf32> to vector<1x16x32xf32>
    %43 = tpu.concatenate %39, %40, %41, %42 in 0 : vector<1x16x32xf32>, vector<1x16x32xf32>, vector<1x16x32xf32>, vector<1x16x32xf32> -> vector<4x16x32xf32>
    %44 = arith.truncf %43 : vector<4x16x32xf32> to vector<4x16x32xbf16>
    "tpu.trace_start"() <{level = 10 : i32, message = "hqd,hkd->hqk"}> : () -> ()
    %cst_14 = arith.constant dense<0.000000e+00> : vector<4x8x16xf32>
    %45 = tpu.matmul %24, %34, %cst_14 {dimension_numbers = #tpu.dot_dimension_numbers<[2], [2], [1], [1], [0, 0, 0, 1, 1, 1], [0], [0]>} : vector<4x8x32xbf16>, vector<4x16x32xbf16>, vector<4x8x16xf32> -> vector<4x8x16xf32>
    "tpu.trace_stop"() : () -> ()
    %46 = tpu.iota {dimensions = array<i32: 0>} : vector<8x16xi32>
    %47 = vector.broadcast %4 : i32 to vector<8x16xi32>
    %48 = arith.addi %47, %46 : vector<8x16xi32>
    %49 = tpu.iota {dimensions = array<i32: 1>} : vector<8x16xi32>
    %50 = arith.cmpi sgt, %49, %48 : vector<8x16xi32>
    %51 = vector.shape_cast %50 : vector<8x16xi1> to vector<1x8x16xi1>
    %cst_15 = arith.constant 0xFF800000 : f32
    %52 = vector.shape_cast %51 : vector<1x8x16xi1> to vector<1x8x16xi1>
    %53 = vector.broadcast %52 : vector<1x8x16xi1> to vector<4x8x16xi1>
    %54 = vector.broadcast %cst_15 : f32 to vector<4x8x16xf32>
    %55 = arith.select %53, %54, %45 : vector<4x8x16xi1>, vector<4x8x16xf32>
    %cst_16 = arith.constant dense<0xFF800000> : vector<4x8xf32>
    %56 = vector.multi_reduction <maximumf>, %55, %cst_16 [2] : vector<4x8x16xf32> to vector<4x8xf32>
    %57 = vector.shape_cast %56 : vector<4x8xf32> to vector<4x8x1xf32>
    %58 = vector.broadcast %57 : vector<4x8x1xf32> to vector<4x8x16xf32>
    %59 = arith.subf %55, %58 : vector<4x8x16xf32>
    %60 = math.exp %59 : vector<4x8x16xf32>
    %cst_17 = arith.constant dense<0.000000e+00> : vector<4x8xf32>
    %61 = vector.multi_reduction <add>, %60, %cst_17 [2] : vector<4x8x16xf32> to vector<4x8xf32>
    %62 = vector.shape_cast %61 : vector<4x8xf32> to vector<4x8x1xf32>
    %63 = tpu.reciprocal %62 {approx = true} : vector<4x8x1xf32> -> vector<4x8x1xf32>
    %64 = vector.broadcast %63 : vector<4x8x1xf32> to vector<4x8x16xf32>
    %65 = arith.mulf %60, %64 : vector<4x8x16xf32>
    %66 = arith.truncf %65 : vector<4x8x16xf32> to vector<4x8x16xbf16>
    "tpu.trace_start"() <{level = 10 : i32, message = "hqk,hkd->hqd"}> : () -> ()
    %cst_18 = arith.constant dense<0.000000e+00> : vector<4x8x32xf32>
    %67 = tpu.matmul %66, %44, %cst_18 {dimension_numbers = #tpu.dot_dimension_numbers<[2], [1], [1], [2], [0, 0, 0, 1, 1, 2], [0], [0]>} : vector<4x8x16xbf16>, vector<4x16x32xbf16>, vector<4x8x32xf32> -> vector<4x8x32xf32>
    "tpu.trace_stop"() : () -> ()
    %68 = vector.extract_strided_slice %67 {offsets = [0, 0, 0], sizes = [1, 8, 32], strides = [1, 1, 1]} : vector<4x8x32xf32> to vector<1x8x32xf32>
    %69 = vector.shape_cast %68 : vector<1x8x32xf32> to vector<8x32xf32>
    %70 = vector.extract_strided_slice %67 {offsets = [1, 0, 0], sizes = [1, 8, 32], strides = [1, 1, 1]} : vector<4x8x32xf32> to vector<1x8x32xf32>
    %71 = vector.shape_cast %70 : vector<1x8x32xf32> to vector<8x32xf32>
    %72 = vector.extract_strided_slice %67 {offsets = [2, 0, 0], sizes = [1, 8, 32], strides = [1, 1, 1]} : vector<4x8x32xf32> to vector<1x8x32xf32>
    %73 = vector.shape_cast %72 : vector<1x8x32xf32> to vector<8x32xf32>
    %74 = vector.extract_strided_slice %67 {offsets = [3, 0, 0], sizes = [1, 8, 32], strides = [1, 1, 1]} : vector<4x8x32xf32> to vector<1x8x32xf32>
    %75 = vector.shape_cast %74 : vector<1x8x32xf32> to vector<8x32xf32>
    %76 = tpu.concatenate %69, %71, %73, %75 in 1 : vector<8x32xf32>, vector<8x32xf32>, vector<8x32xf32>, vector<8x32xf32> -> vector<8x128xf32>
    %77 = arith.truncf %76 : vector<8x128xf32> to vector<8x128xbf16>
    %c0_19 = arith.constant 0 : index
    %c0_20 = arith.constant 0 : index
    %78 = vector.load %arg7[%c0_19, %c0_20] : memref<128x128xbf16, #tpu.memory_space<vmem>>, vector<128x128xbf16>
    %cst_21 = arith.constant dense<0.000000e+00> : vector<8x128xf32>
    %79 = tpu.matmul %77, %78, %cst_21 {dimension_numbers = #tpu.dot_dimension_numbers<[1], [0], [0], [1], [0, 0, 1, 1], [], []>} : vector<8x128xbf16>, vector<128x128xbf16>, vector<8x128xf32> -> vector<8x128xf32>
    %c0_22 = arith.constant 0 : index
    %c0_23 = arith.constant 0 : index
    %80 = vector.load %arg8[%c0_22, %c0_23] : memref<1x128xf32, #tpu.memory_space<vmem>>, vector<1x128xf32>
    %81 = vector.shape_cast %80 : vector<1x128xf32> to vector<128xf32>
    %82 = vector.shape_cast %81 : vector<128xf32> to vector<1x128xf32>
    %83 = vector.broadcast %82 : vector<1x128xf32> to vector<8x128xf32>
    %84 = arith.addf %79, %83 : vector<8x128xf32>
    %85 = arith.addf %84, %1 : vector<8x128xf32>
    %cst_24 = arith.constant dense<0.000000e+00> : vector<8xf32>
    %86 = vector.multi_reduction <add>, %85, %cst_24 [1] : vector<8x128xf32> to vector<8xf32>
    %87 = vector.shape_cast %86 : vector<8xf32> to vector<8x1xf32>
    %cst_25 = arith.constant 1.280000e+02 : f32
    %88 = vector.broadcast %cst_25 : f32 to vector<8x1xf32>
    %89 = arith.divf %87, %88 : vector<8x1xf32>
    %90 = vector.broadcast %89 : vector<8x1xf32> to vector<8x128xf32>
    %91 = arith.subf %85, %90 : vector<8x128xf32>
    %92 = arith.mulf %91, %91 : vector<8x128xf32>
    %cst_26 = arith.constant dense<0.000000e+00> : vector<8xf32>
    %93 = vector.multi_reduction <add>, %92, %cst_26 [1] : vector<8x128xf32> to vector<8xf32>
    %94 = vector.shape_cast %93 : vector<8xf32> to vector<8x1xf32>
    %cst_27 = arith.constant 1.280000e+02 : f32
    %95 = vector.broadcast %cst_27 : f32 to vector<8x1xf32>
    %96 = arith.divf %94, %95 : vector<8x1xf32>
    %97 = vector.broadcast %89 : vector<8x1xf32> to vector<8x128xf32>
    %98 = arith.subf %85, %97 : vector<8x128xf32>
    %cst_28 = arith.constant 9.99999974E-6 : f32
    %99 = vector.broadcast %cst_28 : f32 to vector<8x1xf32>
    %100 = arith.addf %96, %99 : vector<8x1xf32>
    %101 = math.rsqrt %100 : vector<8x1xf32>
    %102 = vector.broadcast %101 : vector<8x1xf32> to vector<8x128xf32>
    %103 = arith.mulf %98, %102 : vector<8x128xf32>
    %c0_29 = arith.constant 0 : index
    %c0_30 = arith.constant 0 : index
    %104 = vector.load %arg9[%c0_29, %c0_30] : memref<1x128xf32, #tpu.memory_space<vmem>>, vector<1x128xf32>
    %105 = vector.shape_cast %104 : vector<1x128xf32> to vector<128xf32>
    %106 = vector.shape_cast %105 : vector<128xf32> to vector<1x128xf32>
    %107 = vector.broadcast %106 : vector<1x128xf32> to vector<8x128xf32>
    %108 = arith.mulf %103, %107 : vector<8x128xf32>
    %c0_31 = arith.constant 0 : index
    %c0_32 = arith.constant 0 : index
    %109 = vector.load %arg10[%c0_31, %c0_32] : memref<1x128xf32, #tpu.memory_space<vmem>>, vector<1x128xf32>
    %110 = vector.shape_cast %109 : vector<1x128xf32> to vector<128xf32>
    %111 = vector.shape_cast %110 : vector<128xf32> to vector<1x128xf32>
    %112 = vector.broadcast %111 : vector<1x128xf32> to vector<8x128xf32>
    %113 = arith.addf %108, %112 : vector<8x128xf32>
    %114 = arith.truncf %113 : vector<8x128xf32> to vector<8x128xbf16>
    %c0_33 = arith.constant 0 : index
    %c0_34 = arith.constant 0 : index
    %115 = vector.load %arg11[%c0_33, %c0_34] : memref<128x512xbf16, #tpu.memory_space<vmem>>, vector<128x512xbf16>
    %cst_35 = arith.constant dense<0.000000e+00> : vector<8x512xf32>
    %116 = tpu.matmul %114, %115, %cst_35 {dimension_numbers = #tpu.dot_dimension_numbers<[1], [0], [0], [1], [0, 0, 1, 1], [], []>} : vector<8x128xbf16>, vector<128x512xbf16>, vector<8x512xf32> -> vector<8x512xf32>
    %c0_36 = arith.constant 0 : index
    %c0_37 = arith.constant 0 : index
    %117 = vector.load %arg12[%c0_36, %c0_37] : memref<1x512xf32, #tpu.memory_space<vmem>>, vector<1x512xf32>
    %118 = vector.shape_cast %117 : vector<1x512xf32> to vector<512xf32>
    %119 = vector.shape_cast %118 : vector<512xf32> to vector<1x512xf32>
    %120 = vector.broadcast %119 : vector<1x512xf32> to vector<8x512xf32>
    %121 = arith.addf %116, %120 : vector<8x512xf32>
    %cst_38 = arith.constant 0.000000e+00 : f32
    %122 = vector.broadcast %cst_38 : f32 to vector<8x512xf32>
    %123 = arith.maximumf %121, %122 : vector<8x512xf32>
    %124 = arith.truncf %123 : vector<8x512xf32> to vector<8x512xbf16>
    %c0_39 = arith.constant 0 : index
    %c0_40 = arith.constant 0 : index
    %125 = vector.load %arg13[%c0_39, %c0_40] : memref<512x128xbf16, #tpu.memory_space<vmem>>, vector<512x128xbf16>
    %cst_41 = arith.constant dense<0.000000e+00> : vector<8x128xf32>
    %126 = tpu.matmul %124, %125, %cst_41 {dimension_numbers = #tpu.dot_dimension_numbers<[1], [0], [0], [1], [0, 0, 1, 1], [], []>} : vector<8x512xbf16>, vector<512x128xbf16>, vector<8x128xf32> -> vector<8x128xf32>
    %c0_42 = arith.constant 0 : index
    %c0_43 = arith.constant 0 : index
    %127 = vector.load %arg14[%c0_42, %c0_43] : memref<1x128xf32, #tpu.memory_space<vmem>>, vector<1x128xf32>
    %128 = vector.shape_cast %127 : vector<1x128xf32> to vector<128xf32>
    %129 = vector.shape_cast %128 : vector<128xf32> to vector<1x128xf32>
    %130 = vector.broadcast %129 : vector<1x128xf32> to vector<8x128xf32>
    %131 = arith.addf %126, %130 : vector<8x128xf32>
    %132 = arith.addf %131, %113 : vector<8x128xf32>
    %cst_44 = arith.constant dense<0.000000e+00> : vector<8xf32>
    %133 = vector.multi_reduction <add>, %132, %cst_44 [1] : vector<8x128xf32> to vector<8xf32>
    %134 = vector.shape_cast %133 : vector<8xf32> to vector<8x1xf32>
    %cst_45 = arith.constant 1.280000e+02 : f32
    %135 = vector.broadcast %cst_45 : f32 to vector<8x1xf32>
    %136 = arith.divf %134, %135 : vector<8x1xf32>
    %137 = vector.broadcast %136 : vector<8x1xf32> to vector<8x128xf32>
    %138 = arith.subf %132, %137 : vector<8x128xf32>
    %139 = arith.mulf %138, %138 : vector<8x128xf32>
    %cst_46 = arith.constant dense<0.000000e+00> : vector<8xf32>
    %140 = vector.multi_reduction <add>, %139, %cst_46 [1] : vector<8x128xf32> to vector<8xf32>
    %141 = vector.shape_cast %140 : vector<8xf32> to vector<8x1xf32>
    %cst_47 = arith.constant 1.280000e+02 : f32
    %142 = vector.broadcast %cst_47 : f32 to vector<8x1xf32>
    %143 = arith.divf %141, %142 : vector<8x1xf32>
    %144 = vector.broadcast %136 : vector<8x1xf32> to vector<8x128xf32>
    %145 = arith.subf %132, %144 : vector<8x128xf32>
    %cst_48 = arith.constant 9.99999974E-6 : f32
    %146 = vector.broadcast %cst_48 : f32 to vector<8x1xf32>
    %147 = arith.addf %143, %146 : vector<8x1xf32>
    %148 = math.rsqrt %147 : vector<8x1xf32>
    %149 = vector.broadcast %148 : vector<8x1xf32> to vector<8x128xf32>
    %150 = arith.mulf %145, %149 : vector<8x128xf32>
    %c0_49 = arith.constant 0 : index
    %c0_50 = arith.constant 0 : index
    %151 = vector.load %arg15[%c0_49, %c0_50] : memref<1x128xf32, #tpu.memory_space<vmem>>, vector<1x128xf32>
    %152 = vector.shape_cast %151 : vector<1x128xf32> to vector<128xf32>
    %153 = vector.shape_cast %152 : vector<128xf32> to vector<1x128xf32>
    %154 = vector.broadcast %153 : vector<1x128xf32> to vector<8x128xf32>
    %155 = arith.mulf %150, %154 : vector<8x128xf32>
    %c0_51 = arith.constant 0 : index
    %c0_52 = arith.constant 0 : index
    %156 = vector.load %arg16[%c0_51, %c0_52] : memref<1x128xf32, #tpu.memory_space<vmem>>, vector<1x128xf32>
    %157 = vector.shape_cast %156 : vector<1x128xf32> to vector<128xf32>
    %158 = vector.shape_cast %157 : vector<128xf32> to vector<1x128xf32>
    %159 = vector.broadcast %158 : vector<1x128xf32> to vector<8x128xf32>
    %160 = arith.addf %155, %159 : vector<8x128xf32>
    %c0_53 = arith.constant 0 : index
    %c0_54 = arith.constant 0 : index
    %c0_55 = arith.constant 0 : index
    %161 = vector.load %arg17[%c0_53, %c0_54, %c0_55] : memref<1x8x128xf32, #tpu.memory_space<vmem>>, vector<1x8x128xf32>
    %162 = vector.shape_cast %161 : vector<1x8x128xf32> to vector<8x128xf32>
    %163 = vector.shape_cast %160 : vector<8x128xf32> to vector<1x8x128xf32>
    tpu.vector_store %arg17[%c0_53, %c0_54, %c0_55], %163 {strides = array<i32>} : memref<1x8x128xf32, #tpu.memory_space<vmem>>, vector<1x8x128xf32>,
    return
  }
  func.func @transform_0(%arg0: i32, %arg1: i32) -> (i32, i32, i32) {
    %c0_i32 = arith.constant 0 : i32
    %c0_i32_0 = arith.constant 0 : i32
    return %arg0, %arg1, %c0_i32 : i32, i32, i32
  }
  func.func @transform_1(%arg0: i32, %arg1: i32) -> (i32, i32, i32) {
    %c0_i32 = arith.constant 0 : i32
    %c0_i32_0 = arith.constant 0 : i32
    %c0_i32_1 = arith.constant 0 : i32
    return %arg0, %c0_i32, %c0_i32_0 : i32, i32, i32
  }
  func.func @transform_2(%arg0: i32, %arg1: i32) -> (i32, i32) {
    %c0_i32 = arith.constant 0 : i32
    %c0_i32_0 = arith.constant 0 : i32
    %c0_i32_1 = arith.constant 0 : i32
    return %c0_i32, %c0_i32_0 : i32, i32
  }
  func.func @transform_3(%arg0: i32, %arg1: i32) -> (i32, i32) {
    %c0_i32 = arith.constant 0 : i32
    %c0_i32_0 = arith.constant 0 : i32
    %c0_i32_1 = arith.constant 0 : i32
    return %c0_i32, %c0_i32_0 : i32, i32
  }
  func.func @transform_4(%arg0: i32, %arg1: i32) -> (i32, i32) {
    %c0_i32 = arith.constant 0 : i32
    %c0_i32_0 = arith.constant 0 : i32
    %c0_i32_1 = arith.constant 0 : i32
    return %c0_i32, %c0_i32_0 : i32, i32
  }
  func.func @transform_5(%arg0: i32, %arg1: i32) -> (i32, i32) {
    %c0_i32 = arith.constant 0 : i32
    %c0_i32_0 = arith.constant 0 : i32
    %c0_i32_1 = arith.constant 0 : i32
    return %c0_i32, %c0_i32_0 : i32, i32
  }
  func.func @transform_6(%arg0: i32, %arg1: i32) -> (i32, i32) {
    %c0_i32 = arith.constant 0 : i32
    %c0_i32_0 = arith.constant 0 : i32
    %c0_i32_1 = arith.constant 0 : i32
    return %c0_i32, %c0_i32_0 : i32, i32
  }
  func.func @transform_7(%arg0: i32, %arg1: i32) -> (i32, i32) {
    %c0_i32 = arith.constant 0 : i32
    %c0_i32_0 = arith.constant 0 : i32
    %c0_i32_1 = arith.constant 0 : i32
    return %c0_i32, %c0_i32_0 : i32, i32
  }
  func.func @transform_8(%arg0: i32, %arg1: i32) -> (i32, i32) {
    %c0_i32 = arith.constant 0 : i32
    %c0_i32_0 = arith.constant 0 : i32
    %c0_i32_1 = arith.constant 0 : i32
    return %c0_i32, %c0_i32_0 : i32, i32
  }
  func.func @transform_9(%arg0: i32, %arg1: i32) -> (i32, i32) {
    %c0_i32 = arith.constant 0 : i32
    %c0_i32_0 = arith.constant 0 : i32
    %c0_i32_1 = arith.constant 0 : i32
    return %c0_i32, %c0_i32_0 : i32, i32
  }
  func.func @transform_10(%arg0: i32, %arg1: i32) -> (i32, i32) {
    %c0_i32 = arith.constant 0 : i32
    %c0_i32_0 = arith.constant 0 : i32
    %c0_i32_1 = arith.constant 0 : i32
    return %c0_i32, %c0_i32_0 : i32, i32
  }
  func.func @transform_11(%arg0: i32, %arg1: i32) -> (i32, i32) {
    %c0_i32 = arith.constant 0 : i32
    %c0_i32_0 = arith.constant 0 : i32
    %c0_i32_1 = arith.constant 0 : i32
    return %c0_i32, %c0_i32_0 : i32, i32
  }
  func.func @transform_12(%arg0: i32, %arg1: i32) -> (i32, i32) {
    %c0_i32 = arith.constant 0 : i32
    %c0_i32_0 = arith.constant 0 : i32
    %c0_i32_1 = arith.constant 0 : i32
    return %c0_i32, %c0_i32_0 : i32, i32
  }
  func.func @transform_13(%arg0: i32, %arg1: i32) -> (i32, i32) {
    %c0_i32 = arith.constant 0 : i32
    %c0_i32_0 = arith.constant 0 : i32
    %c0_i32_1 = arith.constant 0 : i32
    return %c0_i32, %c0_i32_0 : i32, i32
  }
  func.func @transform_14(%arg0: i32, %arg1: i32) -> (i32, i32) {
    %c0_i32 = arith.constant 0 : i32
    %c0_i32_0 = arith.constant 0 : i32
    %c0_i32_1 = arith.constant 0 : i32
    return %c0_i32, %c0_i32_0 : i32, i32
  }
  func.func @transform_15(%arg0: i32, %arg1: i32) -> (i32, i32, i32) {
    %c0_i32 = arith.constant 0 : i32
    %c0_i32_0 = arith.constant 0 : i32
    return %arg0, %arg1, %c0_i32 : i32, i32, i32
  }
}

</mosaic_0001>

<llo_original>
// kernel: tpu_custom_call.1
$region0: #{tpu_custom_call.1}
  #allocation0 [shape = 'u32[]', space=smem, size = 0x4, offset = 0x4, fixed_abs, tag = 'smem constant byte address 0x4 - core index']
  #allocation1 [shape = 'u32[144,128]{1,0:T(1,128)}', space=vmem, size = 0x12000, scoped, tag = 'internal scratch']
  %s0 = inlined_call_operand.hbm [shape: f32[2,16,128], index: 0, kind: input, shape index: {}]
  %s1 = inlined_call_operand.hbm [shape: f32[2,16,128], index: 1, kind: input, shape index: {}]
  %s2 = inlined_call_operand.hbm [shape: bf16[128,128], index: 2, kind: input, shape index: {}]
  %s3 = inlined_call_operand.hbm [shape: bf16[128,128], index: 3, kind: input, shape index: {}]
  %s4 = inlined_call_operand.hbm [shape: bf16[128,128], index: 4, kind: input, shape index: {}]
  %s5 = inlined_call_operand.hbm [shape: bf16[128,128], index: 5, kind: input, shape index: {}]
  %s6 = inlined_call_operand.vmem [shape: f32[1,128], index: 6, kind: input, shape index: {}]
  %s7 = inlined_call_operand.vmem [shape: f32[1,128], index: 7, kind: input, shape index: {}]
  %s8 = inlined_call_operand.vmem [shape: f32[1,128], index: 8, kind: input, shape index: {}]
  %s9 = inlined_call_operand.hbm [shape: bf16[128,512], index: 9, kind: input, shape index: {}]
  %s10 = inlined_call_operand.vmem [shape: f32[1,512], index: 10, kind: input, shape index: {}]
  %s11 = inlined_call_operand.hbm [shape: bf16[512,128], index: 11, kind: input, shape index: {}]
  %s12 = inlined_call_operand.vmem [shape: f32[1,128], index: 12, kind: input, shape index: {}]
  %s13 = inlined_call_operand.vmem [shape: f32[1,128], index: 13, kind: input, shape index: {}]
  %s14 = inlined_call_operand.vmem [shape: f32[1,128], index: 14, kind: input, shape index: {}]
  %s15 = inlined_call_operand.hbm [shape: f32[2,16,128], index: 15, kind: output, shape index: {}]
  %s16 = sld [smem:[#allocation0]]
  $region125: #{tpu_custom_call.1} parent=0
    _
  %s18 = ssub.s32 1, %s16
  %s19 = scalar_select 0, %s18, %s16
  $region1: #{tpu_custom_call.1} parent=0
    #allocation2 [shape = 'u8[8192]{0}', space=vmem, size = 0x2000, scoped, tag = 'input window, operand 0']
    #allocation3 [shape = 's32[2]{0}', space=sflag, size = 0x8, scoped, tag = 'scoped memory for tpu_custom_call.1']
    #allocation4 [shape = 's32[2]{0}', space=sflag, size = 0x8, scoped, tag = 'scoped memory for tpu_custom_call.1']
    #allocation5 [shape = 'u8[16384]{0}', space=vmem, size = 0x4000, scoped, tag = 'input window, operand 1']
    #allocation6 [shape = 's32[2]{0}', space=sflag, size = 0x8, scoped, tag = 'scoped memory for tpu_custom_call.1']
    #allocation7 [shape = 'u8[32768]{0}', space=vmem, size = 0x8000, scoped, tag = 'input window, operand 2, single buffered']
    #allocation8 [shape = 'u8[32768]{0}', space=vmem, size = 0x8000, scoped, tag = 'input window, operand 3, single buffered']
    #allocation9 [shape = 's32[1]{0}', space=sflag, size = 0x4, scoped, tag = 'scoped memory for tpu_custom_call.1']
    #allocation10 [shape = 'u8[32768]{0}', space=vmem, size = 0x8000, scoped, tag = 'input window, operand 4, single buffered']
    #allocation11 [shape = 'u8[32768]{0}', space=vmem, size = 0x8000, scoped, tag = 'input window, operand 5, single buffered']
    #allocation12 [shape = 's32[1]{0}', space=sflag, size = 0x4, scoped, tag = 'scoped memory for tpu_custom_call.1']
    #allocation13 [shape = 'u8[131072]{0}', space=vmem, size = 0x20000, scoped, tag = 'input window, operand 9, single buffered']
    #allocation14 [shape = 'u8[131072]{0}', space=vmem, size = 0x20000, scoped, tag = 'input window, operand 11, single buffered']
    #allocation15 [shape = 's32[1]{0}', space=sflag, size = 0x4, scoped, tag = 'scoped memory for tpu_custom_call.1']
    #allocation16 [shape = 'u8[8192]{0}', space=vmem, size = 0x2000, scoped, tag = 'output window, operand 0']
    %20 = vsyncpa [#allocation3], 0
    %s21 = scalar_lea.sflag [#allocation3], 1
    %22 = vsyncpa %s21, 0
    %23 = vsyncpa [#allocation6], 0
    %s24 = scalar_lea.sflag [#allocation6], 1
    %25 = vsyncpa %s24, 0
    %26 = vsyncpa [#allocation9], 0
    %27 = vsyncpa [#allocation12], 0
    %28 = vsyncpa [#allocation15], 0
    %29 = vsyncpa [#allocation4], 0
    %s30 = scalar_lea.sflag [#allocation4], 1
    %31 = vsyncpa %s30, 0
    loop: start=0, step=1, limit=6
    $region2: #{tpu_custom_call.1} parent=1 // loop_pre_header
      _
    $region3: #{tpu_custom_call.1} parent=1 // loop_header
      %s33 = sphi 0, %s37
      %p34 = scmp.ge.s32.totalorder %s33, 6
      %s40 = sphi 0, %s52
      %s41 = sphi 0, %s48
      %s42 = sphi 0, %s40
      %s43 = sphi 0, %s41
      %s44 = sphi 0, %s42
      %s45 = sphi 0, %s43
      %s57 = sphi 0, %s59
      %s60 = sphi 0, %s57
      %s61 = sphi 0, %s60
      %s77 = sphi 0, %s61
      %s83 = sphi 0, %s85
      %s86 = sphi 0, %s83
      %s87 = sphi 0, %s86
      %s103 = sphi 0, %s87
      %s107 = sphi 0, %s107
      %s109 = sphi 0, %s107
      %s110 = sphi 0, %s109
      %s124 = sphi 0, %s110
      %s128 = sphi 0, %s128
      %s130 = sphi 0, %s128
      %s131 = sphi 0, %s130
      %s145 = sphi 0, %s131
      %s149 = sphi 0, %s149
      %s151 = sphi 0, %s149
      %s152 = sphi 0, %s151
      %s166 = sphi 0, %s152
      %s170 = sphi 0, %s170
      %s172 = sphi 0, %s170
      %s173 = sphi 0, %s172
      %s187 = sphi 0, %s173
      %s191 = sphi 0, %s191
      %s193 = sphi 0, %s191
      %s194 = sphi 0, %s193
      %s208 = sphi 0, %s194
      %s212 = sphi 0, %s212
      %s214 = sphi 0, %s212
      %s215 = sphi 0, %s214
      %s229 = sphi 0, %s215
      %s233 = sphi 0, %s233
      %s235 = sphi 0, %s233
      %s236 = sphi 0, %s235
      %s250 = sphi 0, %s236
      %s254 = sphi 0, %s254
      %s256 = sphi 0, %s254
      %s257 = sphi 0, %s256
      %s271 = sphi 0, %s257
      %s275 = sphi 0, %s275
      %s277 = sphi 0, %s275
      %s278 = sphi 0, %s277
      %s292 = sphi 0, %s278
      %s296 = sphi 0, %s296
      %s298 = sphi 0, %s296
      %s299 = sphi 0, %s298
      %s313 = sphi 0, %s299
      %s317 = sphi 0, %s317
      %s319 = sphi 0, %s317
      %s320 = sphi 0, %s319
      %s334 = sphi 0, %s320
      %s338 = sphi 0, %s338
      %s340 = sphi 0, %s338
      %s341 = sphi 0, %s340
      %s355 = sphi 0, %s341
      %s359 = sphi 0, %s359
      %s361 = sphi 0, %s359
      %s362 = sphi 0, %s361
      %s376 = sphi 0, %s362
      %s384 = sphi 0, %s386
      %s387 = sphi 0, %s384
      %s388 = sphi 0, %s387
      %s404 = sphi 0, %s388
    $region4: #{tpu_custom_call.1} parent=1 // loop_header_branch
      %36 = sbr.rel (%p34) target = $region8
    $region5: #{tpu_custom_call.1} parent=1 // loop_body
      %s38 = ssub.s32 %s33, 1
      %s39 = ssub.s32 %s33, 2
      %s46 = sadd.s32 1, %s41
      %p47 = scmp.ge.s32.totalorder %s46, 2
      %s48 = scalar_select %p47, 0, %s46
      %s49 = sadd.s32 1, %s40
      %s50 = scalar_select %p47, %s49, %s40
      %p51 = scmp.ge.s32.totalorder %s50, 2
      %s52 = scalar_select %p51, 0, %s50
      %s53 = ssub.s32 %s40, %s52
      %s54 = ssub.s32 %s41, %s48
      %s55 = sor.u32 %s53, %s54
      %p56 = scmp.eq.s32.totalorder %s55, 0
      %s58 = sadd.s32 %s57, 1
      %s59 = scalar_select %p56, %s57, %s58
      %p62 = pneg %p56
      %p63 = scmp.eq.s32.totalorder %s33, 3
      %p64 = por %p62, %p63
      %p65 = scmp.ne.s32.totalorder %s57, %s60
      %p66 = scmp.eq.s32.totalorder %s33, 0
      %p67 = por %p65, %p66
      %p68 = scmp.ne.s32.totalorder %s57, %s60
      %p69 = scmp.eq.s32.totalorder %s38, 3
      %p70 = por %p68, %p69
      %p71 = scmp.ne.s32.totalorder %s60, %s61
      %p72 = scmp.eq.s32.totalorder %s38, 0
      %p73 = por %p71, %p72
      %p74 = scmp.ne.s32.totalorder %s60, %s61
      %p75 = scmp.eq.s32.totalorder %s39, 3
      %p76 = por %p74, %p75
      %p78 = scmp.ne.s32.totalorder %s61, %s77
      %p79 = scmp.eq.s32.totalorder %s39, 0
      %p80 = por %p78, %p79
      %s81 = ssub.s32 %s40, %s52
      %p82 = scmp.eq.s32.totalorder %s81, 0
      %s84 = sadd.s32 %s83, 1
      %s85 = scalar_select %p82, %s83, %s84
      %p88 = pneg %p82
      %p89 = scmp.eq.s32.totalorder %s33, 3
      %p90 = por %p88, %p89
      %p91 = scmp.ne.s32.totalorder %s83, %s86
      %p92 = scmp.eq.s32.totalorder %s33, 0
      %p93 = por %p91, %p92
      %p94 = scmp.ne.s32.totalorder %s83, %s86
      %p95 = scmp.eq.s32.totalorder %s38, 3
      %p96 = por %p94, %p95
      %p97 = scmp.ne.s32.totalorder %s86, %s87
      %p98 = scmp.eq.s32.totalorder %s38, 0
      %p99 = por %p97, %p98
      %p100 = scmp.ne.s32.totalorder %s86, %s87
      %p101 = scmp.eq.s32.totalorder %s39, 3
      %p102 = por %p100, %p101
      %p104 = scmp.ne.s32.totalorder %s87, %s103
      %p105 = scmp.eq.s32.totalorder %s39, 0
      %p106 = por %p104, %p105
      %s108 = sadd.s32 %s107, 1
      %p111 = scmp.eq.s32.totalorder %s33, 3
      %p112 = scmp.ne.s32.totalorder %s107, %s109
      %p113 = scmp.eq.s32.totalorder %s33, 0
      %p114 = por %p112, %p113
      %p115 = scmp.ne.s32.totalorder %s107, %s109
      %p116 = scmp.eq.s32.totalorder %s38, 3
      %p117 = por %p115, %p116
      %p118 = scmp.ne.s32.totalorder %s109, %s110
      %p119 = scmp.eq.s32.totalorder %s38, 0
      %p120 = por %p118, %p119
      %p121 = scmp.ne.s32.totalorder %s109, %s110
      %p122 = scmp.eq.s32.totalorder %s39, 3
      %p123 = por %p121, %p122
      %p125 = scmp.ne.s32.totalorder %s110, %s124
      %p126 = scmp.eq.s32.totalorder %s39, 0
      %p127 = por %p125, %p126
      %s129 = sadd.s32 %s128, 1
      %p132 = scmp.eq.s32.totalorder %s33, 3
      %p133 = scmp.ne.s32.totalorder %s128, %s130
      %p134 = scmp.eq.s32.totalorder %s33, 0
      %p135 = por %p133, %p134
      %p136 = scmp.ne.s32.totalorder %s128, %s130
      %p137 = scmp.eq.s32.totalorder %s38, 3
      %p138 = por %p136, %p137
      %p139 = scmp.ne.s32.totalorder %s130, %s131
      %p140 = scmp.eq.s32.totalorder %s38, 0
      %p141 = por %p139, %p140
      %p142 = scmp.ne.s32.totalorder %s130, %s131
      %p143 = scmp.eq.s32.totalorder %s39, 3
      %p144 = por %p142, %p143
      %p146 = scmp.ne.s32.totalorder %s131, %s145
      %p147 = scmp.eq.s32.totalorder %s39, 0
      %p148 = por %p146, %p147
      %s150 = sadd.s32 %s149, 1
      %p153 = scmp.eq.s32.totalorder %s33, 3
      %p154 = scmp.ne.s32.totalorder %s149, %s151
      %p155 = scmp.eq.s32.totalorder %s33, 0
      %p156 = por %p154, %p155
      %p157 = scmp.ne.s32.totalorder %s149, %s151
      %p158 = scmp.eq.s32.totalorder %s38, 3
      %p159 = por %p157, %p158
      %p160 = scmp.ne.s32.totalorder %s151, %s152
      %p161 = scmp.eq.s32.totalorder %s38, 0
      %p162 = por %p160, %p161
      %p163 = scmp.ne.s32.totalorder %s151, %s152
      %p164 = scmp.eq.s32.totalorder %s39, 3
      %p165 = por %p163, %p164
      %p167 = scmp.ne.s32.totalorder %s152, %s166
      %p168 = scmp.eq.s32.totalorder %s39, 0
      %p169 = por %p167, %p168
      %s171 = sadd.s32 %s170, 1
      %p174 = scmp.eq.s32.totalorder %s33, 3
      %p175 = scmp.ne.s32.totalorder %s170, %s172
      %p176 = scmp.eq.s32.totalorder %s33, 0
      %p177 = por %p175, %p176
      %p178 = scmp.ne.s32.totalorder %s170, %s172
      %p179 = scmp.eq.s32.totalorder %s38, 3
      %p180 = por %p178, %p179
      %p181 = scmp.ne.s32.totalorder %s172, %s173
      %p182 = scmp.eq.s32.totalorder %s38, 0
      %p183 = por %p181, %p182
      %p184 = scmp.ne.s32.totalorder %s172, %s173
      %p185 = scmp.eq.s32.totalorder %s39, 3
      %p186 = por %p184, %p185
      %p188 = scmp.ne.s32.totalorder %s173, %s187
      %p189 = scmp.eq.s32.totalorder %s39, 0
      %p190 = por %p188, %p189
      %s192 = sadd.s32 %s191, 1
      %p195 = scmp.eq.s32.totalorder %s33, 3
      %p196 = scmp.ne.s32.totalorder %s191, %s193
      %p197 = scmp.eq.s32.totalorder %s33, 0
      %p198 = por %p196, %p197
      %p199 = scmp.ne.s32.totalorder %s191, %s193
      %p200 = scmp.eq.s32.totalorder %s38, 3
      %p201 = por %p199, %p200
      %p202 = scmp.ne.s32.totalorder %s193, %s194
      %p203 = scmp.eq.s32.totalorder %s38, 0
      %p204 = por %p202, %p203
      %p205 = scmp.ne.s32.totalorder %s193, %s194
      %p206 = scmp.eq.s32.totalorder %s39, 3
      %p207 = por %p205, %p206
      %p209 = scmp.ne.s32.totalorder %s194, %s208
      %p210 = scmp.eq.s32.totalorder %s39, 0
      %p211 = por %p209, %p210
      %s213 = sadd.s32 %s212, 1
      %p216 = scmp.eq.s32.totalorder %s33, 3
      %p217 = scmp.ne.s32.totalorder %s212, %s214
      %p218 = scmp.eq.s32.totalorder %s33, 0
      %p219 = por %p217, %p218
      %p220 = scmp.ne.s32.totalorder %s212, %s214
      %p221 = scmp.eq.s32.totalorder %s38, 3
      %p222 = por %p220, %p221
      %p223 = scmp.ne.s32.totalorder %s214, %s215
      %p224 = scmp.eq.s32.totalorder %s38, 0
      %p225 = por %p223, %p224
      %p226 = scmp.ne.s32.totalorder %s214, %s215
      %p227 = scmp.eq.s32.totalorder %s39, 3
      %p228 = por %p226, %p227
      %p230 = scmp.ne.s32.totalorder %s215, %s229
      %p231 = scmp.eq.s32.totalorder %s39, 0
      %p232 = por %p230, %p231
      %s234 = sadd.s32 %s233, 1
      %p237 = scmp.eq.s32.totalorder %s33, 3
      %p238 = scmp.ne.s32.totalorder %s233, %s235
      %p239 = scmp.eq.s32.totalorder %s33, 0
      %p240 = por %p238, %p239
      %p241 = scmp.ne.s32.totalorder %s233, %s235
      %p242 = scmp.eq.s32.totalorder %s38, 3
      %p243 = por %p241, %p242
      %p244 = scmp.ne.s32.totalorder %s235, %s236
      %p245 = scmp.eq.s32.totalorder %s38, 0
      %p246 = por %p244, %p245
      %p247 = scmp.ne.s32.totalorder %s235, %s236
      %p248 = scmp.eq.s32.totalorder %s39, 3
      %p249 = por %p247, %p248
      %p251 = scmp.ne.s32.totalorder %s236, %s250
      %p252 = scmp.eq.s32.totalorder %s39, 0
      %p253 = por %p251, %p252
      %s255 = sadd.s32 %s254, 1
      %p258 = scmp.eq.s32.totalorder %s33, 3
      %p259 = scmp.ne.s32.totalorder %s254, %s256
      %p260 = scmp.eq.s32.totalorder %s33, 0
      %p261 = por %p259, %p260
      %p262 = scmp.ne.s32.totalorder %s254, %s256
      %p263 = scmp.eq.s32.totalorder %s38, 3
      %p264 = por %p262, %p263
      %p265 = scmp.ne.s32.totalorder %s256, %s257
      %p266 = scmp.eq.s32.totalorder %s38, 0
      %p267 = por %p265, %p266
      %p268 = scmp.ne.s32.totalorder %s256, %s257
      %p269 = scmp.eq.s32.totalorder %s39, 3
      %p270 = por %p268, %p269
      %p272 = scmp.ne.s32.totalorder %s257, %s271
      %p273 = scmp.eq.s32.totalorder %s39, 0
      %p274 = por %p272, %p273
      %s276 = sadd.s32 %s275, 1
      %p279 = scmp.eq.s32.totalorder %s33, 3
      %p280 = scmp.ne.s32.totalorder %s275, %s277
      %p281 = scmp.eq.s32.totalorder %s33, 0
      %p282 = por %p280, %p281
      %p283 = scmp.ne.s32.totalorder %s275, %s277
      %p284 = scmp.eq.s32.totalorder %s38, 3
      %p285 = por %p283, %p284
      %p286 = scmp.ne.s32.totalorder %s277, %s278
      %p287 = scmp.eq.s32.totalorder %s38, 0
      %p288 = por %p286, %p287
      %p289 = scmp.ne.s32.totalorder %s277, %s278
      %p290 = scmp.eq.s32.totalorder %s39, 3
      %p291 = por %p289, %p290
      %p293 = scmp.ne.s32.totalorder %s278, %s292
      %p294 = scmp.eq.s32.totalorder %s39, 0
      %p295 = por %p293, %p294
      %s297 = sadd.s32 %s296, 1
      %p300 = scmp.eq.s32.totalorder %s33, 3
      %p301 = scmp.ne.s32.totalorder %s296, %s298
      %p302 = scmp.eq.s32.totalorder %s33, 0
      %p303 = por %p301, %p302
      %p304 = scmp.ne.s32.totalorder %s296, %s298
      %p305 = scmp.eq.s32.totalorder %s38, 3
      %p306 = por %p304, %p305
      %p307 = scmp.ne.s32.totalorder %s298, %s299
      %p308 = scmp.eq.s32.totalorder %s38, 0
      %p309 = por %p307, %p308
      %p310 = scmp.ne.s32.totalorder %s298, %s299
      %p311 = scmp.eq.s32.totalorder %s39, 3
      %p312 = por %p310, %p311
      %p314 = scmp.ne.s32.totalorder %s299, %s313
      %p315 = scmp.eq.s32.totalorder %s39, 0
      %p316 = por %p314, %p315
      %s318 = sadd.s32 %s317, 1
      %p321 = scmp.eq.s32.totalorder %s33, 3
      %p322 = scmp.ne.s32.totalorder %s317, %s319
      %p323 = scmp.eq.s32.totalorder %s33, 0
      %p324 = por %p322, %p323
      %p325 = scmp.ne.s32.totalorder %s317, %s319
      %p326 = scmp.eq.s32.totalorder %s38, 3
      %p327 = por %p325, %p326
      %p328 = scmp.ne.s32.totalorder %s319, %s320
      %p329 = scmp.eq.s32.totalorder %s38, 0
      %p330 = por %p328, %p329
      %p331 = scmp.ne.s32.totalorder %s319, %s320
      %p332 = scmp.eq.s32.totalorder %s39, 3
      %p333 = por %p331, %p332
      %p335 = scmp.ne.s32.totalorder %s320, %s334
      %p336 = scmp.eq.s32.totalorder %s39, 0
      %p337 = por %p335, %p336
      %s339 = sadd.s32 %s338, 1
      %p342 = scmp.eq.s32.totalorder %s33, 3
      %p343 = scmp.ne.s32.totalorder %s338, %s340
      %p344 = scmp.eq.s32.totalorder %s33, 0
      %p345 = por %p343, %p344
      %p346 = scmp.ne.s32.totalorder %s338, %s340
      %p347 = scmp.eq.s32.totalorder %s38, 3
      %p348 = por %p346, %p347
      %p349 = scmp.ne.s32.totalorder %s340, %s341
      %p350 = scmp.eq.s32.totalorder %s38, 0
      %p351 = por %p349, %p350
      %p352 = scmp.ne.s32.totalorder %s340, %s341
      %p353 = scmp.eq.s32.totalorder %s39, 3
      %p354 = por %p352, %p353
      %p356 = scmp.ne.s32.totalorder %s341, %s355
      %p357 = scmp.eq.s32.totalorder %s39, 0
      %p358 = por %p356, %p357
      %s360 = sadd.s32 %s359, 1
      %p363 = scmp.eq.s32.totalorder %s33, 3
      %p364 = scmp.ne.s32.totalorder %s359, %s361
      %p365 = scmp.eq.s32.totalorder %s33, 0
      %p366 = por %p364, %p365
      %p367 = scmp.ne.s32.totalorder %s359, %s361
      %p368 = scmp.eq.s32.totalorder %s38, 3
      %p369 = por %p367, %p368
      %p370 = scmp.ne.s32.totalorder %s361, %s362
      %p371 = scmp.eq.s32.totalorder %s38, 0
      %p372 = por %p370, %p371
      %p373 = scmp.ne.s32.totalorder %s361, %s362
      %p374 = scmp.eq.s32.totalorder %s39, 3
      %p375 = por %p373, %p374
      %p377 = scmp.ne.s32.totalorder %s362, %s376
      %p378 = scmp.eq.s32.totalorder %s39, 0
      %p379 = por %p377, %p378
      %s380 = ssub.s32 %s40, %s52
      %s381 = ssub.s32 %s41, %s48
      %s382 = sor.u32 %s380, %s381
      %p383 = scmp.eq.s32.totalorder %s382, 0
      %s385 = sadd.s32 %s384, 1
      %s386 = scalar_select %p383, %s384, %s385
      %p389 = pneg %p383
      %p390 = scmp.eq.s32.totalorder %s33, 3
      %p391 = por %p389, %p390
      %p392 = scmp.ne.s32.totalorder %s384, %s387
      %p393 = scmp.eq.s32.totalorder %s33, 0
      %p394 = por %p392, %p393
      %p395 = scmp.ne.s32.totalorder %s384, %s387
      %p396 = scmp.eq.s32.totalorder %s38, 3
      %p397 = por %p395, %p396
      %p398 = scmp.ne.s32.totalorder %s387, %s388
      %p399 = scmp.eq.s32.totalorder %s38, 0
      %p400 = por %p398, %p399
      %p401 = scmp.ne.s32.totalorder %s387, %s388
      %p402 = scmp.eq.s32.totalorder %s39, 3
      %p403 = por %p401, %p402
      %p405 = scmp.ne.s32.totalorder %s388, %s404
      %p406 = scmp.eq.s32.totalorder %s39, 0
      %p407 = por %p405, %p406
      %p408 = scmp.le.s32.totalorder 1, %s33
      %p409 = scmp.lt.s32.totalorder %s33, 5
      %p410 = pnand %p408, %p409
      %p411 = pneg %p410
      // Predicated region
      $region9: #{tpu_custom_call.1} parent=5 // pred_check
        _
      $region10: #{tpu_custom_call.1} parent=5 // pred_check_branch
        %413 = sbr.rel (%p410) target = $region12
      $region11: #{tpu_custom_call.1} parent=5 // pred_region
        %s414 = ssub.s32 %s33, 1
        // Predicated region
        $region13: #{tpu_custom_call.1} parent=11 // pred_check
          %p415 = pneg %p120
        $region14: #{tpu_custom_call.1} parent=11 // pred_check_branch
          %417 = sbr.rel (%p415) target = $region16
        $region15: #{tpu_custom_call.1} parent=11 // pred_region
          %s419 = ssub.s32 1024, 1024
          %420 = vsyncadd [#allocation6], %s419
          %s421 = sshll.u32 [#allocation7], 4
          %s422 = int_to_ptr.vmem [resolvable:$true] %s421
          %427 = dma.hbm_to_vmem [thread:$0]  %s2, 1024, %s422, [#allocation6], 64, 64, 4
        $region16: #{tpu_custom_call.1} parent=11 // pred_fallthru
          _
        // Predicated region
        $region17: #{tpu_custom_call.1} parent=11 // pred_check
          %p428 = pneg %p141
        $region18: #{tpu_custom_call.1} parent=11 // pred_check_branch
          %430 = sbr.rel (%p428) target = $region20
        $region19: #{tpu_custom_call.1} parent=11 // pred_region
          %s432 = ssub.s32 1024, 1024
          %433 = vsyncadd [#allocation9], %s432
          %s434 = sshll.u32 [#allocation8], 4
          %s435 = int_to_ptr.vmem [resolvable:$true] %s434
          %440 = dma.hbm_to_vmem [thread:$0]  %s3, 1024, %s435, [#allocation9], 64, 64, 4
        $region20: #{tpu_custom_call.1} parent=11 // pred_fallthru
          _
        // Predicated region
        $region21: #{tpu_custom_call.1} parent=11 // pred_check
          %p441 = pneg %p162
        $region22: #{tpu_custom_call.1} parent=11 // pred_check_branch
          %443 = sbr.rel (%p441) target = $region24
        $region23: #{tpu_custom_call.1} parent=11 // pred_region
          %s445 = ssub.s32 1024, 1024
          %446 = vsyncadd [#allocation9], %s445
          %s447 = sshll.u32 [#allocation10], 4
          %s448 = int_to_ptr.vmem [resolvable:$true] %s447
          %453 = dma.hbm_to_vmem [thread:$0]  %s4, 1024, %s448, [#allocation9], 64, 64, 4
        $region24: #{tpu_custom_call.1} parent=11 // pred_fallthru
          _
        // Predicated region
        $region25: #{tpu_custom_call.1} parent=11 // pred_check
          %p454 = pneg %p183
        $region26: #{tpu_custom_call.1} parent=11 // pred_check_branch
          %456 = sbr.rel (%p454) target = $region28
        $region27: #{tpu_custom_call.1} parent=11 // pred_region
          %s458 = ssub.s32 1024, 1024
          %459 = vsyncadd [#allocation12], %s458
          %s460 = sshll.u32 [#allocation11], 4
          %s461 = int_to_ptr.vmem [resolvable:$true] %s460
          %466 = dma.hbm_to_vmem [thread:$0]  %s5, 1024, %s461, [#allocation12], 64, 64, 4
        $region28: #{tpu_custom_call.1} parent=11 // pred_fallthru
          _
        // Predicated region
        $region29: #{tpu_custom_call.1} parent=11 // pred_check
          %p467 = pneg %p204
        $region30: #{tpu_custom_call.1} parent=11 // pred_check_branch
          %469 = sbr.rel (%p467) target = $region32
        $region31: #{tpu_custom_call.1} parent=11 // pred_region
          _
        $region32: #{tpu_custom_call.1} parent=11 // pred_fallthru
          _
        // Predicated region
        $region33: #{tpu_custom_call.1} parent=11 // pred_check
          %p470 = pneg %p225
        $region34: #{tpu_custom_call.1} parent=11 // pred_check_branch
          %472 = sbr.rel (%p470) target = $region36
        $region35: #{tpu_custom_call.1} parent=11 // pred_region
          _
        $region36: #{tpu_custom_call.1} parent=11 // pred_fallthru
          _
        // Predicated region
        $region37: #{tpu_custom_call.1} parent=11 // pred_check
          %p473 = pneg %p246
        $region38: #{tpu_custom_call.1} parent=11 // pred_check_branch
          %475 = sbr.rel (%p473) target = $region40
        $region39: #{tpu_custom_call.1} parent=11 // pred_region
          _
        $region40: #{tpu_custom_call.1} parent=11 // pred_fallthru
          _
        // Predicated region
        $region41: #{tpu_custom_call.1} parent=11 // pred_check
          %p476 = pneg %p267
        $region42: #{tpu_custom_call.1} parent=11 // pred_check_branch
          %478 = sbr.rel (%p476) target = $region44
        $region43: #{tpu_custom_call.1} parent=11 // pred_region
          %s480 = ssub.s32 4096, 4096
          %481 = vsyncadd [#allocation12], %s480
          %s482 = sshll.u32 [#allocation13], 4
          %s483 = int_to_ptr.vmem [resolvable:$true] %s482
          %488 = dma.hbm_to_vmem [thread:$0]  %s9, 4096, %s483, [#allocation12], 256, 256, 16
        $region44: #{tpu_custom_call.1} parent=11 // pred_fallthru
          _
        // Predicated region
        $region45: #{tpu_custom_call.1} parent=11 // pred_check
          %p489 = pneg %p288
        $region46: #{tpu_custom_call.1} parent=11 // pred_check_branch
          %491 = sbr.rel (%p489) target = $region48
        $region47: #{tpu_custom_call.1} parent=11 // pred_region
          _
        $region48: #{tpu_custom_call.1} parent=11 // pred_fallthru
          _
        // Predicated region
        $region49: #{tpu_custom_call.1} parent=11 // pred_check
          %p492 = pneg %p309
        $region50: #{tpu_custom_call.1} parent=11 // pred_check_branch
          %494 = sbr.rel (%p492) target = $region52
        $region51: #{tpu_custom_call.1} parent=11 // pred_region
          %s496 = ssub.s32 4096, 4096
          %497 = vsyncadd [#allocation15], %s496
          %s498 = sshll.u32 [#allocation14], 4
          %s499 = int_to_ptr.vmem [resolvable:$true] %s498
          %504 = dma.hbm_to_vmem [thread:$0]  %s11, 4096, %s499, [#allocation15], 64, 64, 4
        $region52: #{tpu_custom_call.1} parent=11 // pred_fallthru
          _
        // Predicated region
        $region53: #{tpu_custom_call.1} parent=11 // pred_check
          %p505 = pneg %p330
        $region54: #{tpu_custom_call.1} parent=11 // pred_check_branch
          %507 = sbr.rel (%p505) target = $region56
        $region55: #{tpu_custom_call.1} parent=11 // pred_region
          _
        $region56: #{tpu_custom_call.1} parent=11 // pred_fallthru
          _
        // Predicated region
        $region57: #{tpu_custom_call.1} parent=11 // pred_check
          %p508 = pneg %p351
        $region58: #{tpu_custom_call.1} parent=11 // pred_check_branch
          %510 = sbr.rel (%p508) target = $region60
        $region59: #{tpu_custom_call.1} parent=11 // pred_region
          _
        $region60: #{tpu_custom_call.1} parent=11 // pred_fallthru
          _
        // Predicated region
        $region61: #{tpu_custom_call.1} parent=11 // pred_check
          %p511 = pneg %p372
        $region62: #{tpu_custom_call.1} parent=11 // pred_check_branch
          %513 = sbr.rel (%p511) target = $region64
        $region63: #{tpu_custom_call.1} parent=11 // pred_region
          _
        $region64: #{tpu_custom_call.1} parent=11 // pred_fallthru
          _
      $region12: #{tpu_custom_call.1} parent=5 // pred_fallthru
        _
      %p514 = scmp.lt.s32.totalorder %s33, 4
      // Predicated region
      $region65: #{tpu_custom_call.1} parent=5 // pred_check
        %p515 = pneg %p514
      $region66: #{tpu_custom_call.1} parent=5 // pred_check_branch
        %517 = sbr.rel (%p515) target = $region68
      $region67: #{tpu_custom_call.1} parent=5 // pred_region
        // Predicated region
        $region69: #{tpu_custom_call.1} parent=67 // pred_check
          %p518 = pneg %p67
        $region70: #{tpu_custom_call.1} parent=67 // pred_check_branch
          %520 = sbr.rel (%p518) target = $region72
        $region71: #{tpu_custom_call.1} parent=67 // pred_region
          %s521 = sand.u32 %s57, 1
          %s522 = scalar_lea.sflag [#allocation3], %s521
          %s523 = sand.u32 %s57, 1
          %s524 = smul.addr %s523, 8
          %s525 = scalar_lea.vmem [#allocation2], %s524
          %s527 = ssub.s32 128, 128
          %528 = vsyncadd %s522, %s527
          %s529 = smul.addr %s40, 2
          %s530 = sadd.s32 %s41, %s529
          %s531 = smul.addr %s530, 128
          %s532 = scalar_lea.hbm %s0, %s531
          %s534 = sshll.u32 %s525, 4
          %s535 = int_to_ptr.vmem [resolvable:$true] %s534
          %537 = dma.hbm_to_vmem [thread:$0]  %s532, 128, %s535, %s522
        $region72: #{tpu_custom_call.1} parent=67 // pred_fallthru
          _
        // Predicated region
        $region73: #{tpu_custom_call.1} parent=67 // pred_check
          %p538 = pneg %p93
        $region74: #{tpu_custom_call.1} parent=67 // pred_check_branch
          %540 = sbr.rel (%p538) target = $region76
        $region75: #{tpu_custom_call.1} parent=67 // pred_region
          %s541 = sand.u32 %s33, 1
          %s542 = scalar_lea.sflag [#allocation6], %s541
          %s543 = sand.u32 %s83, 1
          %s544 = smul.addr %s543, 16
          %s545 = scalar_lea.vmem [#allocation5], %s544
          %s547 = ssub.s32 256, 256
          %548 = vsyncadd %s542, %s547
          %s549 = smul.addr %s40, 2
          %s550 = smul.addr %s549, 128
          %s551 = scalar_lea.hbm %s1, %s550
          %s552 = sshll.u32 %s545, 4
          %s553 = int_to_ptr.vmem [resolvable:$true] %s552
          %558 = dma.hbm_to_vmem [thread:$0]  %s551, 256, %s553, %s542, 128, 128, 8
        $region76: #{tpu_custom_call.1} parent=67 // pred_fallthru
          _
      $region68: #{tpu_custom_call.1} parent=5 // pred_fallthru
        _
      %p559 = scmp.le.s32.totalorder 1, %s33
      %p560 = scmp.lt.s32.totalorder %s33, 5
      %p561 = pnand %p559, %p560
      %p562 = pneg %p561
      // Predicated region
      $region77: #{tpu_custom_call.1} parent=5 // pred_check
        _
      $region78: #{tpu_custom_call.1} parent=5 // pred_check_branch
        %564 = sbr.rel (%p561) target = $region80
      $region79: #{tpu_custom_call.1} parent=5 // pred_region
        %s565 = ssub.s32 %s33, 1
        %s566 = sand.u32 %s60, 1
        %s567 = scalar_lea.sflag [#allocation3], %s566
        %s568 = sand.u32 %s60, 1
        %s569 = smul.addr %s568, 8
        %s570 = scalar_lea.vmem [#allocation2], %s569
        // Predicated region
        $region81: #{tpu_custom_call.1} parent=79 // pred_check
          %p571 = pneg %p73
        $region82: #{tpu_custom_call.1} parent=79 // pred_check_branch
          %573 = sbr.rel (%p571) target = $region84
        $region83: #{tpu_custom_call.1} parent=79 // pred_region
          %574 = dma.done %s567, 128
        $region84: #{tpu_custom_call.1} parent=79 // pred_fallthru
          _
        %s575 = sand.u32 %s38, 1
        %s576 = scalar_lea.sflag [#allocation6], %s575
        %s577 = sand.u32 %s86, 1
        %s578 = smul.addr %s577, 16
        %s579 = scalar_lea.vmem [#allocation5], %s578
        // Predicated region
        $region85: #{tpu_custom_call.1} parent=79 // pred_check
          %p580 = pneg %p99
        $region86: #{tpu_custom_call.1} parent=79 // pred_check_branch
          %582 = sbr.rel (%p580) target = $region88
        $region87: #{tpu_custom_call.1} parent=79 // pred_region
          %583 = dma.done %s576, 256
        $region88: #{tpu_custom_call.1} parent=79 // pred_fallthru
          _
        // Predicated region
        $region89: #{tpu_custom_call.1} parent=79 // pred_check
          %p584 = pneg %p120
        $region90: #{tpu_custom_call.1} parent=79 // pred_check_branch
          %586 = sbr.rel (%p584) target = $region92
        $region91: #{tpu_custom_call.1} parent=79 // pred_region
          %587 = dma.done [#allocation6], 1024
        $region92: #{tpu_custom_call.1} parent=79 // pred_fallthru
          _
        // Predicated region
        $region93: #{tpu_custom_call.1} parent=79 // pred_check
          %p588 = pneg %p141
        $region94: #{tpu_custom_call.1} parent=79 // pred_check_branch
          %590 = sbr.rel (%p588) target = $region96
        $region95: #{tpu_custom_call.1} parent=79 // pred_region
          %591 = dma.done [#allocation9], 1024
        $region96: #{tpu_custom_call.1} parent=79 // pred_fallthru
          _
        // Predicated region
        $region97: #{tpu_custom_call.1} parent=79 // pred_check
          %p592 = pneg %p162
        $region98: #{tpu_custom_call.1} parent=79 // pred_check_branch
          %594 = sbr.rel (%p592) target = $region100
        $region99: #{tpu_custom_call.1} parent=79 // pred_region
          %595 = dma.done [#allocation9], 1024
        $region100: #{tpu_custom_call.1} parent=79 // pred_fallthru
          _
        // Predicated region
        $region101: #{tpu_custom_call.1} parent=79 // pred_check
          %p596 = pneg %p183
        $region102: #{tpu_custom_call.1} parent=79 // pred_check_branch
          %598 = sbr.rel (%p596) target = $region104
        $region103: #{tpu_custom_call.1} parent=79 // pred_region
          %599 = dma.done [#allocation12], 1024
        $region104: #{tpu_custom_call.1} parent=79 // pred_fallthru
          _
        // Predicated region
        $region105: #{tpu_custom_call.1} parent=79 // pred_check
          %p600 = pneg %p267
        $region106: #{tpu_custom_call.1} parent=79 // pred_check_branch
          %602 = sbr.rel (%p600) target = $region108
        $region107: #{tpu_custom_call.1} parent=79 // pred_region
          %603 = dma.done [#allocation12], 4096
        $region108: #{tpu_custom_call.1} parent=79 // pred_fallthru
          _
        // Predicated region
        $region109: #{tpu_custom_call.1} parent=79 // pred_check
          %p604 = pneg %p309
        $region110: #{tpu_custom_call.1} parent=79 // pred_check_branch
          %606 = sbr.rel (%p604) target = $region112
        $region111: #{tpu_custom_call.1} parent=79 // pred_region
          %607 = dma.done [#allocation15], 4096
        $region112: #{tpu_custom_call.1} parent=79 // pred_fallthru
          _
        %s608 = sand.u32 %s60, 1
        %s609 = scalar_lea.sflag [#allocation3], %s608
        %s610 = sand.u32 %s60, 1
        %s611 = smul.addr %s610, 8
        %s612 = scalar_lea.vmem [#allocation2], %s611
        %p613 = pneg %p73
        %p614 = pneg %p70
        %s615 = sand.u32 %s38, 1
        %s616 = scalar_lea.sflag [#allocation6], %s615
        %s617 = sand.u32 %s86, 1
        %s618 = smul.addr %s617, 16
        %s619 = scalar_lea.vmem [#allocation5], %s618
        %p620 = pneg %p99
        %p621 = pneg %p96
        %p622 = pneg %p120
        %p623 = pneg %p117
        %p624 = pneg %p141
        %p625 = pneg %p138
        %p626 = pneg %p162
        %p627 = pneg %p159
        %p628 = pneg %p183
        %p629 = pneg %p180
        %p630 = pneg %p204
        %p631 = pneg %p201
        %p632 = pneg %p225
        %p633 = pneg %p222
        %p634 = pneg %p246
        %p635 = pneg %p243
        %p636 = pneg %p267
        %p637 = pneg %p264
        %p638 = pneg %p288
        %p639 = pneg %p285
        %p640 = pneg %p309
        %p641 = pneg %p306
        %p642 = pneg %p330
        %p643 = pneg %p327
        %p644 = pneg %p351
        %p645 = pneg %p348
        %p646 = pneg %p372
        %p647 = pneg %p369
        %p648 = pneg %p400
        %p649 = pneg %p397
        %s650 = sand.u32 %s387, 1
        %s651 = scalar_lea.sflag [#allocation4], %s650
        %s652 = sand.u32 %s387, 1
        %s653 = smul.addr %s652, 8
        %s654 = scalar_lea.vmem [#allocation16], %s653
        %v656 = vld [vmem:[%s570] sm:$0xff]
        %v657 = vld [vmem:[%s579] sm:$0xff]
        %v658 = vld [vmem:[%s579 + $0x8] sm:$0xff]
        %s659 = smul.u32 %s43, 8
        %v660 = vpack.c.bf16 %v656, %v656
        %v661 = vpack.c.bf16 %v658, %v657
        %v662 = vld [vmem:[#allocation7] sm:$0xf]
        %v663 = vld [vmem:[#allocation7 + $0x4] sm:$0xf]
        %v664 = vld [vmem:[#allocation7 + $0x8] sm:$0xf]
        %v665 = vld [vmem:[#allocation7 + $0xc] sm:$0xf]
        %v666 = vld [vmem:[#allocation7 + $0x10] sm:$0xf]
        %v667 = vld [vmem:[#allocation7 + $0x14] sm:$0xf]
        %v668 = vld [vmem:[#allocation7 + $0x18] sm:$0xf]
        %v669 = vld [vmem:[#allocation7 + $0x1c] sm:$0xf]
        %v670 = vld [vmem:[#allocation7 + $0x20] sm:$0xf]
        %v671 = vld [vmem:[#allocation7 + $0x24] sm:$0xf]
        %v672 = vld [vmem:[#allocation7 + $0x28] sm:$0xf]
        %v673 = vld [vmem:[#allocation7 + $0x2c] sm:$0xf]
        %v674 = vld [vmem:[#allocation7 + $0x30] sm:$0xf]
        %v675 = vld [vmem:[#allocation7 + $0x34] sm:$0xf]
        %v676 = vld [vmem:[#allocation7 + $0x38] sm:$0xf]
        %v677 = vld [vmem:[#allocation7 + $0x3c] sm:$0xf]
        %v694 = vunpack.c.l.b16 %v662
        %v695 = vunpack.c.l.b16 %v663
        %v696 = vunpack.c.l.b16 %v664
        %v697 = vunpack.c.l.b16 %v665
        %v698 = vunpack.c.l.b16 %v666
        %v699 = vunpack.c.l.b16 %v667
        %v700 = vunpack.c.l.b16 %v668
        %v701 = vunpack.c.l.b16 %v669
        %v702 = vunpack.c.l.b16 %v670
        %v703 = vunpack.c.l.b16 %v671
        %v704 = vunpack.c.l.b16 %v672
        %v705 = vunpack.c.l.b16 %v673
        %v706 = vunpack.c.l.b16 %v674
        %v707 = vunpack.c.l.b16 %v675
        %v708 = vunpack.c.l.b16 %v676
        %v709 = vunpack.c.l.b16 %v677
        %v710 = vpack.c.b16 %v695, %v694
        %v711 = vpack.c.b16 %v697, %v696
        %v712 = vpack.c.b16 %v699, %v698
        %v713 = vpack.c.b16 %v701, %v700
        %v714 = vpack.c.b16 %v703, %v702
        %v715 = vpack.c.b16 %v705, %v704
        %v716 = vpack.c.b16 %v707, %v706
        %v717 = vpack.c.b16 %v709, %v708
        %726 = vmatprep.subr.bf16.mxu0 0
        %727 = vmatpush1.bf16.msra.mxu0 %v717
        %728 = vmatprep.subr.bf16.mxu0 0
        %729 = vmatpush1.bf16.msra.mxu0 %v716
        %730 = vmatprep.subr.bf16.mxu0 0
        %731 = vmatpush1.bf16.msra.mxu0 %v715
        %732 = vmatprep.subr.bf16.mxu0 0
        %733 = vmatpush1.bf16.msra.mxu0 %v714
        %734 = vmatprep.subr.bf16.mxu0 0
        %735 = vmatpush1.bf16.msra.mxu0 %v713
        %736 = vmatprep.subr.bf16.mxu0 0
        %737 = vmatpush1.bf16.msra.mxu0 %v712
        %738 = vmatprep.subr.bf16.mxu0 0
        %739 = vmatpush1.bf16.msra.mxu0 %v711
        %740 = vmatprep.subr.bf16.mxu0 0
        %741 = vmatpush1.bf16.msra.mxu0 %v710
        %742 = vmatprep.subr.bf16.mxu0 0
        %743 = vmatpush2.bf16.msra.mxu0 0
        %744 = vmatprep.subr.bf16.mxu0 0
        %745 = vmatpush2.bf16.msra.mxu0 0
        %746 = vmatprep.subr.bf16.mxu0 0
        %747 = vmatpush2.bf16.msra.mxu0 0
        %748 = vmatprep.subr.bf16.mxu0 0
        %749 = vmatpush2.bf16.msra.mxu0 0
        %750 = vmatprep.subr.bf16.mxu0 0
        %751 = vmatpush2.bf16.msra.mxu0 0
        %752 = vmatprep.subr.bf16.mxu0 0
        %753 = vmatpush2.bf16.msra.mxu0 0
        %754 = vmatprep.subr.bf16.mxu0 0
        %755 = vmatpush2.bf16.msra.mxu0 0
        %756 = vmatprep.subr.bf16.mxu0 0
        %757 = vmatpush2.bf16.msra.mxu0 0
        %758 = vmatprep.mubr.bf16.mxu0 0
        %759 = vmatmul.mubr.bf16.gmra.mxu0 %v660
        %v760 = vpop.f32.mrf.mxu0
        %v761 = vadd.f32 0.0, %v760
        %v762 = vpop.f32.mrf.mxu0
        %v763 = vpop.f32.mrf.mxu0
        %v764 = vpop.f32.mrf.mxu0
        %765 = vdwg.mxu0
        %v766 = vmul.f32 %v761, 0.17677669
        %v767 = vld [vmem:[#allocation8] sm:$0xf]
        %v768 = vld [vmem:[#allocation8 + $0x4] sm:$0xf]
        %v769 = vld [vmem:[#allocation8 + $0x8] sm:$0xf]
        %v770 = vld [vmem:[#allocation8 + $0xc] sm:$0xf]
        %v771 = vld [vmem:[#allocation8 + $0x10] sm:$0xf]
        %v772 = vld [vmem:[#allocation8 + $0x14] sm:$0xf]
        %v773 = vld [vmem:[#allocation8 + $0x18] sm:$0xf]
        %v774 = vld [vmem:[#allocation8 + $0x1c] sm:$0xf]
        %v775 = vld [vmem:[#allocation8 + $0x20] sm:$0xf]
        %v776 = vld [vmem:[#allocation8 + $0x24] sm:$0xf]
        %v777 = vld [vmem:[#allocation8 + $0x28] sm:$0xf]
        %v778 = vld [vmem:[#allocation8 + $0x2c] sm:$0xf]
        %v779 = vld [vmem:[#allocation8 + $0x30] sm:$0xf]
        %v780 = vld [vmem:[#allocation8 + $0x34] sm:$0xf]
        %v781 = vld [vmem:[#allocation8 + $0x38] sm:$0xf]
        %v782 = vld [vmem:[#allocation8 + $0x3c] sm:$0xf]
        %v799 = vunpack.c.l.b16 %v767
        %v800 = vunpack.c.l.b16 %v768
        %v801 = vunpack.c.l.b16 %v769
        %v802 = vunpack.c.l.b16 %v770
        %v803 = vunpack.c.l.b16 %v771
        %v804 = vunpack.c.l.b16 %v772
        %v805 = vunpack.c.l.b16 %v773
        %v806 = vunpack.c.l.b16 %v774
        %v807 = vunpack.c.l.b16 %v775
        %v808 = vunpack.c.l.b16 %v776
        %v809 = vunpack.c.l.b16 %v777
        %v810 = vunpack.c.l.b16 %v778
        %v811 = vunpack.c.l.b16 %v779
        %v812 = vunpack.c.l.b16 %v780
        %v813 = vunpack.c.l.b16 %v781
        %v814 = vunpack.c.l.b16 %v782
        %v815 = vpack.c.b16 %v800, %v799
        %v816 = vpack.c.b16 %v802, %v801
        %v817 = vpack.c.b16 %v804, %v803
        %v818 = vpack.c.b16 %v806, %v805
        %v819 = vpack.c.b16 %v808, %v807
        %v820 = vpack.c.b16 %v810, %v809
        %v821 = vpack.c.b16 %v812, %v811
        %v822 = vpack.c.b16 %v814, %v813
        %831 = vmatprep.subr.bf16.mxu0 0
        %832 = vmatpush1.bf16.msra.mxu0 %v822
        %833 = vmatprep.subr.bf16.mxu0 0
        %834 = vmatpush1.bf16.msra.mxu0 %v821
        %835 = vmatprep.subr.bf16.mxu0 0
        %836 = vmatpush1.bf16.msra.mxu0 %v820
        %837 = vmatprep.subr.bf16.mxu0 0
        %838 = vmatpush1.bf16.msra.mxu0 %v819
        %839 = vmatprep.subr.bf16.mxu0 0
        %840 = vmatpush1.bf16.msra.mxu0 %v818
        %841 = vmatprep.subr.bf16.mxu0 0
        %842 = vmatpush1.bf16.msra.mxu0 %v817
        %843 = vmatprep.subr.bf16.mxu0 0
        %844 = vmatpush1.bf16.msra.mxu0 %v816
        %845 = vmatprep.subr.bf16.mxu0 0
        %846 = vmatpush1.bf16.msra.mxu0 %v815
        %847 = vmatprep.subr.bf16.mxu0 0
        %848 = vmatpush2.bf16.msra.mxu0 0
        %849 = vmatprep.subr.bf16.mxu0 0
        %850 = vmatpush2.bf16.msra.mxu0 0
        %851 = vmatprep.subr.bf16.mxu0 0
        %852 = vmatpush2.bf16.msra.mxu0 0
        %853 = vmatprep.subr.bf16.mxu0 0
        %854 = vmatpush2.bf16.msra.mxu0 0
        %855 = vmatprep.subr.bf16.mxu0 0
        %856 = vmatpush2.bf16.msra.mxu0 0
        %857 = vmatprep.subr.bf16.mxu0 0
        %858 = vmatpush2.bf16.msra.mxu0 0
        %859 = vmatprep.subr.bf16.mxu0 0
        %860 = vmatpush2.bf16.msra.mxu0 0
        %861 = vmatprep.subr.bf16.mxu0 0
        %862 = vmatpush2.bf16.msra.mxu0 0
        %863 = vmatprep.mubr.bf16.mxu0 0
        %864 = vmatmul.mubr.bf16.gmra.mxu0 %v661
        %v865 = vpop.f32.mrf.mxu0
        %v866 = vadd.f32 0.0, %v865
        %v867 = vpop.f32.mrf.mxu0
        %v868 = vpop.f32.mrf.mxu0
        %v869 = vadd.f32 0.0, %v868
        %v870 = vpop.f32.mrf.mxu0
        %871 = vdwg.mxu0
        %v872 = vld [vmem:[#allocation10] sm:$0xf]
        %v873 = vld [vmem:[#allocation10 + $0x4] sm:$0xf]
        %v874 = vld [vmem:[#allocation10 + $0x8] sm:$0xf]
        %v875 = vld [vmem:[#allocation10 + $0xc] sm:$0xf]
        %v876 = vld [vmem:[#allocation10 + $0x10] sm:$0xf]
        %v877 = vld [vmem:[#allocation10 + $0x14] sm:$0xf]
        %v878 = vld [vmem:[#allocation10 + $0x18] sm:$0xf]
        %v879 = vld [vmem:[#allocation10 + $0x1c] sm:$0xf]
        %v880 = vld [vmem:[#allocation10 + $0x20] sm:$0xf]
        %v881 = vld [vmem:[#allocation10 + $0x24] sm:$0xf]
        %v882 = vld [vmem:[#allocation10 + $0x28] sm:$0xf]
        %v883 = vld [vmem:[#allocation10 + $0x2c] sm:$0xf]
        %v884 = vld [vmem:[#allocation10 + $0x30] sm:$0xf]
        %v885 = vld [vmem:[#allocation10 + $0x34] sm:$0xf]
        %v886 = vld [vmem:[#allocation10 + $0x38] sm:$0xf]
        %v887 = vld [vmem:[#allocation10 + $0x3c] sm:$0xf]
        %v904 = vunpack.c.l.b16 %v872
        %v905 = vunpack.c.l.b16 %v873
        %v906 = vunpack.c.l.b16 %v874
        %v907 = vunpack.c.l.b16 %v875
        %v908 = vunpack.c.l.b16 %v876
        %v909 = vunpack.c.l.b16 %v877
        %v910 = vunpack.c.l.b16 %v878
        %v911 = vunpack.c.l.b16 %v879
        %v912 = vunpack.c.l.b16 %v880
        %v913 = vunpack.c.l.b16 %v881
        %v914 = vunpack.c.l.b16 %v882
        %v915 = vunpack.c.l.b16 %v883
        %v916 = vunpack.c.l.b16 %v884
        %v917 = vunpack.c.l.b16 %v885
        %v918 = vunpack.c.l.b16 %v886
        %v919 = vunpack.c.l.b16 %v887
        %v920 = vpack.c.b16 %v905, %v904
        %v921 = vpack.c.b16 %v907, %v906
        %v922 = vpack.c.b16 %v909, %v908
        %v923 = vpack.c.b16 %v911, %v910
        %v924 = vpack.c.b16 %v913, %v912
        %v925 = vpack.c.b16 %v915, %v914
        %v926 = vpack.c.b16 %v917, %v916
        %v927 = vpack.c.b16 %v919, %v918
        %936 = vmatprep.subr.bf16.mxu0 0
        %937 = vmatpush1.bf16.msra.mxu0 %v927
        %938 = vmatprep.subr.bf16.mxu0 0
        %939 = vmatpush1.bf16.msra.mxu0 %v926
        %940 = vmatprep.subr.bf16.mxu0 0
        %941 = vmatpush1.bf16.msra.mxu0 %v925
        %942 = vmatprep.subr.bf16.mxu0 0
        %943 = vmatpush1.bf16.msra.mxu0 %v924
        %944 = vmatprep.subr.bf16.mxu0 0
        %945 = vmatpush1.bf16.msra.mxu0 %v923
        %946 = vmatprep.subr.bf16.mxu0 0
        %947 = vmatpush1.bf16.msra.mxu0 %v922
        %948 = vmatprep.subr.bf16.mxu0 0
        %949 = vmatpush1.bf16.msra.mxu0 %v921
        %950 = vmatprep.subr.bf16.mxu0 0
        %951 = vmatpush1.bf16.msra.mxu0 %v920
        %952 = vmatprep.subr.bf16.mxu0 0
        %953 = vmatpush2.bf16.msra.mxu0 0
        %954 = vmatprep.subr.bf16.mxu0 0
        %955 = vmatpush2.bf16.msra.mxu0 0
        %956 = vmatprep.subr.bf16.mxu0 0
        %957 = vmatpush2.bf16.msra.mxu0 0
        %958 = vmatprep.subr.bf16.mxu0 0
        %959 = vmatpush2.bf16.msra.mxu0 0
        %960 = vmatprep.subr.bf16.mxu0 0
        %961 = vmatpush2.bf16.msra.mxu0 0
        %962 = vmatprep.subr.bf16.mxu0 0
        %963 = vmatpush2.bf16.msra.mxu0 0
        %964 = vmatprep.subr.bf16.mxu0 0
        %965 = vmatpush2.bf16.msra.mxu0 0
        %966 = vmatprep.subr.bf16.mxu0 0
        %967 = vmatpush2.bf16.msra.mxu0 0
        %968 = vmatprep.mubr.bf16.mxu0 0
        %969 = vmatmul.mubr.bf16.gmra.mxu0 %v661
        %v970 = vpop.f32.mrf.mxu0
        %v971 = vadd.f32 0.0, %v970
        %v972 = vpop.f32.mrf.mxu0
        %v973 = vpop.f32.mrf.mxu0
        %v974 = vadd.f32 0.0, %v973
        %v975 = vpop.f32.mrf.mxu0
        %976 = vdwg.mxu0
        %978 = vrot.lane.b32.xlu0 %v766, 96
        %v979 = vpop.permute.xlu0 %978
        %981 = vrot.lane.b32.xlu0 %v766, 64
        %v982 = vpop.permute.xlu0 %981
        %984 = vrot.lane.b32.xlu0 %v766, 32
        %v985 = vpop.permute.xlu0 %984
        %v987 = vpack.c.bf16 %v766, %v766
        %v988 = vpack.c.bf16 %v979, %v979
        %v989 = vpack.c.bf16 %v982, %v982
        %v990 = vpack.c.bf16 %v985, %v985
        %993 = vrot.lane.b32.xlu0 %v866, 96
        %v994 = vpop.permute.xlu0 %993
        %995 = vrot.lane.b32.xlu0 %v869, 96
        %v996 = vpop.permute.xlu0 %995
        %999 = vrot.lane.b32.xlu0 %v866, 64
        %v1000 = vpop.permute.xlu0 %999
        %1001 = vrot.lane.b32.xlu0 %v869, 64
        %v1002 = vpop.permute.xlu0 %1001
        %1005 = vrot.lane.b32.xlu0 %v866, 32
        %v1006 = vpop.permute.xlu0 %1005
        %1007 = vrot.lane.b32.xlu0 %v869, 32
        %v1008 = vpop.permute.xlu0 %1007
        %v1011 = vpack.c.bf16 %v869, %v866
        %v1012 = vpack.c.bf16 %v996, %v994
        %v1013 = vpack.c.bf16 %v1002, %v1000
        %v1014 = vpack.c.bf16 %v1008, %v1006
        %1017 = vrot.lane.b32.xlu0 %v971, 96
        %v1018 = vpop.permute.xlu0 %1017
        %1019 = vrot.lane.b32.xlu0 %v974, 96
        %v1020 = vpop.permute.xlu0 %1019
        %1023 = vrot.lane.b32.xlu0 %v971, 64
        %v1024 = vpop.permute.xlu0 %1023
        %1025 = vrot.lane.b32.xlu0 %v974, 64
        %v1026 = vpop.permute.xlu0 %1025
        %1029 = vrot.lane.b32.xlu0 %v971, 32
        %v1030 = vpop.permute.xlu0 %1029
        %1031 = vrot.lane.b32.xlu0 %v974, 32
        %v1032 = vpop.permute.xlu0 %1031
        %v1035 = vpack.c.bf16 %v974, %v971
        %v1036 = vpack.c.bf16 %v1020, %v1018
        %v1037 = vpack.c.bf16 %v1026, %v1024
        %v1038 = vpack.c.bf16 %v1032, %v1030
        %vm1039 = vcmask 261120
        %v1041 = vsel %vm1039, %v987, 0
        %v1044 = vsel %vm1039, %v1011, 0
        %1046 = vmatprep.subr.bf16.mxu0 0
        %1047 = vmatpush1.bf16.xpose.msra.mxu0 0
        %1048 = vmatprep.subr.bf16.mxu0 0
        %1049 = vmatpush1.bf16.xpose.msra.mxu0 0
        %1050 = vmatprep.subr.bf16.mxu0 0
        %1051 = vmatpush1.bf16.xpose.msra.mxu0 0
        %1052 = vmatprep.subr.bf16.mxu0 0
        %1053 = vmatpush1.bf16.xpose.msra.mxu0 0
        %1054 = vmatprep.subr.bf16.mxu0 0
        %1055 = vmatpush1.bf16.xpose.msra.mxu0 0
        %1056 = vmatprep.subr.bf16.mxu0 0
        %1057 = vmatpush1.bf16.xpose.msra.mxu0 0
        %1058 = vmatprep.subr.bf16.mxu0 0
        %1059 = vmatpush1.bf16.xpose.msra.mxu0 0
        %1060 = vmatprep.subr.bf16.mxu0 0
        %1061 = vmatpush1.bf16.xpose.msra.mxu0 %v1044
        %1062 = vmatprep.subr.bf16.mxu0 0
        %1063 = vmatpush2.bf16.xpose.msra.mxu0 0
        %1064 = vmatprep.subr.bf16.mxu0 0
        %1065 = vmatpush2.bf16.xpose.msra.mxu0 0
        %1066 = vmatprep.subr.bf16.mxu0 0
        %1067 = vmatpush2.bf16.xpose.msra.mxu0 0
        %1068 = vmatprep.subr.bf16.mxu0 0
        %1069 = vmatpush2.bf16.xpose.msra.mxu0 0
        %1070 = vmatprep.subr.bf16.mxu0 0
        %1071 = vmatpush2.bf16.xpose.msra.mxu0 0
        %1072 = vmatprep.subr.bf16.mxu0 0
        %1073 = vmatpush2.bf16.xpose.msra.mxu0 0
        %1074 = vmatprep.subr.bf16.mxu0 0
        %1075 = vmatpush2.bf16.xpose.msra.mxu0 0
        %1076 = vmatprep.subr.bf16.mxu0 0
        %1077 = vmatpush2.bf16.xpose.msra.mxu0 0
        %1078 = vmatprep.mubr.bf16.mxu0 0
        %1079 = vmatmul.mubr.bf16.gmra.mxu0 %v1041
        %v1080 = vpop.f32.mrf.mxu0
        %v1081 = vadd.f32 0.0, %v1080
        %v1082 = vpop.f32.mrf.mxu0
        %v1083 = vpop.f32.mrf.mxu0
        %v1084 = vpop.f32.mrf.mxu0
        %1085 = vdwg.mxu0
        %v1087 = vsel %vm1039, %v988, 0
        %v1090 = vsel %vm1039, %v1012, 0
        %1092 = vmatprep.subr.bf16.mxu0 0
        %1093 = vmatpush1.bf16.xpose.msra.mxu0 0
        %1094 = vmatprep.subr.bf16.mxu0 0
        %1095 = vmatpush1.bf16.xpose.msra.mxu0 0
        %1096 = vmatprep.subr.bf16.mxu0 0
        %1097 = vmatpush1.bf16.xpose.msra.mxu0 0
        %1098 = vmatprep.subr.bf16.mxu0 0
        %1099 = vmatpush1.bf16.xpose.msra.mxu0 0
        %1100 = vmatprep.subr.bf16.mxu0 0
        %1101 = vmatpush1.bf16.xpose.msra.mxu0 0
        %1102 = vmatprep.subr.bf16.mxu0 0
        %1103 = vmatpush1.bf16.xpose.msra.mxu0 0
        %1104 = vmatprep.subr.bf16.mxu0 0
        %1105 = vmatpush1.bf16.xpose.msra.mxu0 0
        %1106 = vmatprep.subr.bf16.mxu0 0
        %1107 = vmatpush1.bf16.xpose.msra.mxu0 %v1090
        %1108 = vmatprep.subr.bf16.mxu0 0
        %1109 = vmatpush2.bf16.xpose.msra.mxu0 0
        %1110 = vmatprep.subr.bf16.mxu0 0
        %1111 = vmatpush2.bf16.xpose.msra.mxu0 0
        %1112 = vmatprep.subr.bf16.mxu0 0
        %1113 = vmatpush2.bf16.xpose.msra.mxu0 0
        %1114 = vmatprep.subr.bf16.mxu0 0
        %1115 = vmatpush2.bf16.xpose.msra.mxu0 0
        %1116 = vmatprep.subr.bf16.mxu0 0
        %1117 = vmatpush2.bf16.xpose.msra.mxu0 0
        %1118 = vmatprep.subr.bf16.mxu0 0
        %1119 = vmatpush2.bf16.xpose.msra.mxu0 0
        %1120 = vmatprep.subr.bf16.mxu0 0
        %1121 = vmatpush2.bf16.xpose.msra.mxu0 0
        %1122 = vmatprep.subr.bf16.mxu0 0
        %1123 = vmatpush2.bf16.xpose.msra.mxu0 0
        %1124 = vmatprep.mubr.bf16.mxu0 0
        %1125 = vmatmul.mubr.bf16.gmra.mxu0 %v1087
        %v1126 = vpop.f32.mrf.mxu0
        %v1127 = vadd.f32 0.0, %v1126
        %v1128 = vpop.f32.mrf.mxu0
        %v1129 = vpop.f32.mrf.mxu0
        %v1130 = vpop.f32.mrf.mxu0
        %1131 = vdwg.mxu0
        %v1133 = vsel %vm1039, %v989, 0
        %v1136 = vsel %vm1039, %v1013, 0
        %1138 = vmatprep.subr.bf16.mxu0 0
        %1139 = vmatpush1.bf16.xpose.msra.mxu0 0
        %1140 = vmatprep.subr.bf16.mxu0 0
        %1141 = vmatpush1.bf16.xpose.msra.mxu0 0
        %1142 = vmatprep.subr.bf16.mxu0 0
        %1143 = vmatpush1.bf16.xpose.msra.mxu0 0
        %1144 = vmatprep.subr.bf16.mxu0 0
        %1145 = vmatpush1.bf16.xpose.msra.mxu0 0
        %1146 = vmatprep.subr.bf16.mxu0 0
        %1147 = vmatpush1.bf16.xpose.msra.mxu0 0
        %1148 = vmatprep.subr.bf16.mxu0 0
        %1149 = vmatpush1.bf16.xpose.msra.mxu0 0
        %1150 = vmatprep.subr.bf16.mxu0 0
        %1151 = vmatpush1.bf16.xpose.msra.mxu0 0
        %1152 = vmatprep.subr.bf16.mxu0 0
        %1153 = vmatpush1.bf16.xpose.msra.mxu0 %v1136
        %1154 = vmatprep.subr.bf16.mxu0 0
        %1155 = vmatpush2.bf16.xpose.msra.mxu0 0
        %1156 = vmatprep.subr.bf16.mxu0 0
        %1157 = vmatpush2.bf16.xpose.msra.mxu0 0
        %1158 = vmatprep.subr.bf16.mxu0 0
        %1159 = vmatpush2.bf16.xpose.msra.mxu0 0
        %1160 = vmatprep.subr.bf16.mxu0 0
        %1161 = vmatpush2.bf16.xpose.msra.mxu0 0
        %1162 = vmatprep.subr.bf16.mxu0 0
        %1163 = vmatpush2.bf16.xpose.msra.mxu0 0
        %1164 = vmatprep.subr.bf16.mxu0 0
        %1165 = vmatpush2.bf16.xpose.msra.mxu0 0
        %1166 = vmatprep.subr.bf16.mxu0 0
        %1167 = vmatpush2.bf16.xpose.msra.mxu0 0
        %1168 = vmatprep.subr.bf16.mxu0 0
        %1169 = vmatpush2.bf16.xpose.msra.mxu0 0
        %1170 = vmatprep.mubr.bf16.mxu0 0
        %1171 = vmatmul.mubr.bf16.gmra.mxu0 %v1133
        %v1172 = vpop.f32.mrf.mxu0
        %v1173 = vadd.f32 0.0, %v1172
        %v1174 = vpop.f32.mrf.mxu0
        %v1175 = vpop.f32.mrf.mxu0
        %v1176 = vpop.f32.mrf.mxu0
        %1177 = vdwg.mxu0
        %v1179 = vsel %vm1039, %v990, 0
        %v1182 = vsel %vm1039, %v1014, 0
        %1184 = vmatprep.subr.bf16.mxu0 0
        %1185 = vmatpush1.bf16.xpose.msra.mxu0 0
        %1186 = vmatprep.subr.bf16.mxu0 0
        %1187 = vmatpush1.bf16.xpose.msra.mxu0 0
        %1188 = vmatprep.subr.bf16.mxu0 0
        %1189 = vmatpush1.bf16.xpose.msra.mxu0 0
        %1190 = vmatprep.subr.bf16.mxu0 0
        %1191 = vmatpush1.bf16.xpose.msra.mxu0 0
        %1192 = vmatprep.subr.bf16.mxu0 0
        %1193 = vmatpush1.bf16.xpose.msra.mxu0 0
        %1194 = vmatprep.subr.bf16.mxu0 0
        %1195 = vmatpush1.bf16.xpose.msra.mxu0 0
        %1196 = vmatprep.subr.bf16.mxu0 0
        %1197 = vmatpush1.bf16.xpose.msra.mxu0 0
        %1198 = vmatprep.subr.bf16.mxu0 0
        %1199 = vmatpush1.bf16.xpose.msra.mxu0 %v1182
        %1200 = vmatprep.subr.bf16.mxu0 0
        %1201 = vmatpush2.bf16.xpose.msra.mxu0 0
        %1202 = vmatprep.subr.bf16.mxu0 0
        %1203 = vmatpush2.bf16.xpose.msra.mxu0 0
        %1204 = vmatprep.subr.bf16.mxu0 0
        %1205 = vmatpush2.bf16.xpose.msra.mxu0 0
        %1206 = vmatprep.subr.bf16.mxu0 0
        %1207 = vmatpush2.bf16.xpose.msra.mxu0 0
        %1208 = vmatprep.subr.bf16.mxu0 0
        %1209 = vmatpush2.bf16.xpose.msra.mxu0 0
        %1210 = vmatprep.subr.bf16.mxu0 0
        %1211 = vmatpush2.bf16.xpose.msra.mxu0 0
        %1212 = vmatprep.subr.bf16.mxu0 0
        %1213 = vmatpush2.bf16.xpose.msra.mxu0 0
        %1214 = vmatprep.subr.bf16.mxu0 0
        %1215 = vmatpush2.bf16.xpose.msra.mxu0 0
        %1216 = vmatprep.mubr.bf16.mxu0 0
        %1217 = vmatmul.mubr.bf16.gmra.mxu0 %v1179
        %v1218 = vpop.f32.mrf.mxu0
        %v1219 = vadd.f32 0.0, %v1218
        %v1220 = vpop.f32.mrf.mxu0
        %v1221 = vpop.f32.mrf.mxu0
        %v1222 = vpop.f32.mrf.mxu0
        %1223 = vdwg.mxu0
        %v1224 = vlaneseq
        %v1225 = vshrl.u32 %v1224, 7
        %v1226 = vstv %s659
        %v1227 = vadd.s32 %v1226, %v1225
        %v1228 = vlaneseq
        %v1229 = vand.u32 %v1228, 127
        %vm1230 = vcmp.gt.s32.totalorder %v1229, %v1227
        %v1231 = vsel %vm1230, 1, 0
        %vm1232 = vcmp.eq.s32.totalorder %v1231, 1
        %v1233 = vsel %vm1232, -inf, %v1081
        %v1234 = vsel %vm1232, -inf, %v1127
        %v1235 = vsel %vm1232, -inf, %v1173
        %v1236 = vsel %vm1232, -inf, %v1219
        %vm1237 = vcmask 130048
        %v1238 = vsel %vm1237, %v1233, -inf
        %1239 = vmax.xlane.f32.xlu0 %v1238
        %v1240 = vpop.xlane.xlu0 %1239
        %v1241 = vsel %vm1237, %v1234, -inf
        %1242 = vmax.xlane.f32.xlu0 %v1241
        %v1243 = vpop.xlane.xlu0 %1242
        %v1244 = vsel %vm1237, %v1235, -inf
        %1245 = vmax.xlane.f32.xlu0 %v1244
        %v1246 = vpop.xlane.xlu0 %1245
        %v1247 = vsel %vm1237, %v1236, -inf
        %1248 = vmax.xlane.f32.xlu0 %v1247
        %v1249 = vpop.xlane.xlu0 %1248
        %v1250 = vsub.f32 %v1233, %v1240
        %v1251 = vsub.f32 %v1234, %v1243
        %v1252 = vsub.f32 %v1235, %v1246
        %v1253 = vsub.f32 %v1236, %v1249
        %v1254 = vmul.f32 %v1250, 1.442695
        %v1255 = vpow.pop %v1254
        %v1256 = vmul.f32 %v1251, 1.442695
        %v1257 = vpow.pop %v1256
        %v1258 = vmul.f32 %v1252, 1.442695
        %v1259 = vpow.pop %v1258
        %v1260 = vmul.f32 %v1253, 1.442695
        %v1261 = vpow.pop %v1260
        %v1262 = vsel %vm1237, %v1255, 0.0
        %1263 = vadd.xlane.f32.xlu0 %v1262
        %v1264 = vpop.xlane.xlu0 %1263
        %v1265 = vsel %vm1237, %v1257, 0.0
        %1266 = vadd.xlane.f32.xlu0 %v1265
        %v1267 = vpop.xlane.xlu0 %1266
        %v1268 = vsel %vm1237, %v1259, 0.0
        %1269 = vadd.xlane.f32.xlu0 %v1268
        %v1270 = vpop.xlane.xlu0 %1269
        %v1271 = vsel %vm1237, %v1261, 0.0
        %1272 = vadd.xlane.f32.xlu0 %v1271
        %v1273 = vpop.xlane.xlu0 %1272
        %v1274 = vrcp.pop %v1264
        %v1275 = vrcp.pop %v1267
        %v1276 = vrcp.pop %v1270
        %v1277 = vrcp.pop %v1273
        %v1278 = vmul.f32 %v1255, %v1274
        %v1279 = vmul.f32 %v1257, %v1275
        %v1280 = vmul.f32 %v1259, %v1276
        %v1281 = vmul.f32 %v1261, %v1277
        %v1282 = vpack.c.bf16 %v1278, %v1278
        %v1283 = vpack.c.bf16 %v1279, %v1279
        %v1284 = vpack.c.bf16 %v1280, %v1280
        %v1285 = vpack.c.bf16 %v1281, %v1281
        %v1287 = vsel %vm1237, %v1282, 0
        %1289 = vmatprep.subr.bf16.mxu0 0
        %1290 = vmatpush1.bf16.msra.mxu0 0
        %1291 = vmatprep.subr.bf16.mxu0 0
        %1292 = vmatpush1.bf16.msra.mxu0 0
        %1293 = vmatprep.subr.bf16.mxu0 0
        %1294 = vmatpush1.bf16.msra.mxu0 0
        %1295 = vmatprep.subr.bf16.mxu0 0
        %1296 = vmatpush1.bf16.msra.mxu0 0
        %1297 = vmatprep.subr.bf16.mxu0 0
        %1298 = vmatpush1.bf16.msra.mxu0 0
        %1299 = vmatprep.subr.bf16.mxu0 0
        %1300 = vmatpush1.bf16.msra.mxu0 0
        %1301 = vmatprep.subr.bf16.mxu0 0
        %1302 = vmatpush1.bf16.msra.mxu0 0
        %1303 = vmatprep.subr.bf16.mxu0 0
        %1304 = vmatpush1.bf16.msra.mxu0 %v1035
        %1305 = vmatprep.subr.bf16.mxu0 0
        %1306 = vmatpush2.bf16.msra.mxu0 0
        %1307 = vmatprep.subr.bf16.mxu0 0
        %1308 = vmatpush2.bf16.msra.mxu0 0
        %1309 = vmatprep.subr.bf16.mxu0 0
        %1310 = vmatpush2.bf16.msra.mxu0 0
        %1311 = vmatprep.subr.bf16.mxu0 0
        %1312 = vmatpush2.bf16.msra.mxu0 0
        %1313 = vmatprep.subr.bf16.mxu0 0
        %1314 = vmatpush2.bf16.msra.mxu0 0
        %1315 = vmatprep.subr.bf16.mxu0 0
        %1316 = vmatpush2.bf16.msra.mxu0 0
        %1317 = vmatprep.subr.bf16.mxu0 0
        %1318 = vmatpush2.bf16.msra.mxu0 0
        %1319 = vmatprep.subr.bf16.mxu0 0
        %1320 = vmatpush2.bf16.msra.mxu0 0
        %1321 = vmatprep.mubr.bf16.mxu0 0
        %1322 = vmatmul.mubr.bf16.gmra.mxu0 %v1287
        %v1323 = vpop.f32.mrf.mxu0
        %v1324 = vadd.f32 0.0, %v1323
        %v1325 = vpop.f32.mrf.mxu0
        %v1326 = vpop.f32.mrf.mxu0
        %v1327 = vpop.f32.mrf.mxu0
        %1328 = vdwg.mxu0
        %v1330 = vsel %vm1237, %v1283, 0
        %1332 = vmatprep.subr.bf16.mxu0 0
        %1333 = vmatpush1.bf16.msra.mxu0 0
        %1334 = vmatprep.subr.bf16.mxu0 0
        %1335 = vmatpush1.bf16.msra.mxu0 0
        %1336 = vmatprep.subr.bf16.mxu0 0
        %1337 = vmatpush1.bf16.msra.mxu0 0
        %1338 = vmatprep.subr.bf16.mxu0 0
        %1339 = vmatpush1.bf16.msra.mxu0 0
        %1340 = vmatprep.subr.bf16.mxu0 0
        %1341 = vmatpush1.bf16.msra.mxu0 0
        %1342 = vmatprep.subr.bf16.mxu0 0
        %1343 = vmatpush1.bf16.msra.mxu0 0
        %1344 = vmatprep.subr.bf16.mxu0 0
        %1345 = vmatpush1.bf16.msra.mxu0 0
        %1346 = vmatprep.subr.bf16.mxu0 0
        %1347 = vmatpush1.bf16.msra.mxu0 %v1036
        %1348 = vmatprep.subr.bf16.mxu0 0
        %1349 = vmatpush2.bf16.msra.mxu0 0
        %1350 = vmatprep.subr.bf16.mxu0 0
        %1351 = vmatpush2.bf16.msra.mxu0 0
        %1352 = vmatprep.subr.bf16.mxu0 0
        %1353 = vmatpush2.bf16.msra.mxu0 0
        %1354 = vmatprep.subr.bf16.mxu0 0
        %1355 = vmatpush2.bf16.msra.mxu0 0
        %1356 = vmatprep.subr.bf16.mxu0 0
        %1357 = vmatpush2.bf16.msra.mxu0 0
        %1358 = vmatprep.subr.bf16.mxu0 0
        %1359 = vmatpush2.bf16.msra.mxu0 0
        %1360 = vmatprep.subr.bf16.mxu0 0
        %1361 = vmatpush2.bf16.msra.mxu0 0
        %1362 = vmatprep.subr.bf16.mxu0 0
        %1363 = vmatpush2.bf16.msra.mxu0 0
        %1364 = vmatprep.mubr.bf16.mxu0 0
        %1365 = vmatmul.mubr.bf16.gmra.mxu0 %v1330
        %v1366 = vpop.f32.mrf.mxu0
        %v1367 = vadd.f32 0.0, %v1366
        %v1368 = vpop.f32.mrf.mxu0
        %v1369 = vpop.f32.mrf.mxu0
        %v1370 = vpop.f32.mrf.mxu0
        %1371 = vdwg.mxu0
        %v1373 = vsel %vm1237, %v1284, 0
        %1375 = vmatprep.subr.bf16.mxu0 0
        %1376 = vmatpush1.bf16.msra.mxu0 0
        %1377 = vmatprep.subr.bf16.mxu0 0
        %1378 = vmatpush1.bf16.msra.mxu0 0
        %1379 = vmatprep.subr.bf16.mxu0 0
        %1380 = vmatpush1.bf16.msra.mxu0 0
        %1381 = vmatprep.subr.bf16.mxu0 0
        %1382 = vmatpush1.bf16.msra.mxu0 0
        %1383 = vmatprep.subr.bf16.mxu0 0
        %1384 = vmatpush1.bf16.msra.mxu0 0
        %1385 = vmatprep.subr.bf16.mxu0 0
        %1386 = vmatpush1.bf16.msra.mxu0 0
        %1387 = vmatprep.subr.bf16.mxu0 0
        %1388 = vmatpush1.bf16.msra.mxu0 0
        %1389 = vmatprep.subr.bf16.mxu0 0
        %1390 = vmatpush1.bf16.msra.mxu0 %v1037
        %1391 = vmatprep.subr.bf16.mxu0 0
        %1392 = vmatpush2.bf16.msra.mxu0 0
        %1393 = vmatprep.subr.bf16.mxu0 0
        %1394 = vmatpush2.bf16.msra.mxu0 0
        %1395 = vmatprep.subr.bf16.mxu0 0
        %1396 = vmatpush2.bf16.msra.mxu0 0
        %1397 = vmatprep.subr.bf16.mxu0 0
        %1398 = vmatpush2.bf16.msra.mxu0 0
        %1399 = vmatprep.subr.bf16.mxu0 0
        %1400 = vmatpush2.bf16.msra.mxu0 0
        %1401 = vmatprep.subr.bf16.mxu0 0
        %1402 = vmatpush2.bf16.msra.mxu0 0
        %1403 = vmatprep.subr.bf16.mxu0 0
        %1404 = vmatpush2.bf16.msra.mxu0 0
        %1405 = vmatprep.subr.bf16.mxu0 0
        %1406 = vmatpush2.bf16.msra.mxu0 0
        %1407 = vmatprep.mubr.bf16.mxu0 0
        %1408 = vmatmul.mubr.bf16.gmra.mxu0 %v1373
        %v1409 = vpop.f32.mrf.mxu0
        %v1410 = vadd.f32 0.0, %v1409
        %v1411 = vpop.f32.mrf.mxu0
        %v1412 = vpop.f32.mrf.mxu0
        %v1413 = vpop.f32.mrf.mxu0
        %1414 = vdwg.mxu0
        %v1416 = vsel %vm1237, %v1285, 0
        %1418 = vmatprep.subr.bf16.mxu0 0
        %1419 = vmatpush1.bf16.msra.mxu0 0
        %1420 = vmatprep.subr.bf16.mxu0 0
        %1421 = vmatpush1.bf16.msra.mxu0 0
        %1422 = vmatprep.subr.bf16.mxu0 0
        %1423 = vmatpush1.bf16.msra.mxu0 0
        %1424 = vmatprep.subr.bf16.mxu0 0
        %1425 = vmatpush1.bf16.msra.mxu0 0
        %1426 = vmatprep.subr.bf16.mxu0 0
        %1427 = vmatpush1.bf16.msra.mxu0 0
        %1428 = vmatprep.subr.bf16.mxu0 0
        %1429 = vmatpush1.bf16.msra.mxu0 0
        %1430 = vmatprep.subr.bf16.mxu0 0
        %1431 = vmatpush1.bf16.msra.mxu0 0
        %1432 = vmatprep.subr.bf16.mxu0 0
        %1433 = vmatpush1.bf16.msra.mxu0 %v1038
        %1434 = vmatprep.subr.bf16.mxu0 0
        %1435 = vmatpush2.bf16.msra.mxu0 0
        %1436 = vmatprep.subr.bf16.mxu0 0
        %1437 = vmatpush2.bf16.msra.mxu0 0
        %1438 = vmatprep.subr.bf16.mxu0 0
        %1439 = vmatpush2.bf16.msra.mxu0 0
        %1440 = vmatprep.subr.bf16.mxu0 0
        %1441 = vmatpush2.bf16.msra.mxu0 0
        %1442 = vmatprep.subr.bf16.mxu0 0
        %1443 = vmatpush2.bf16.msra.mxu0 0
        %1444 = vmatprep.subr.bf16.mxu0 0
        %1445 = vmatpush2.bf16.msra.mxu0 0
        %1446 = vmatprep.subr.bf16.mxu0 0
        %1447 = vmatpush2.bf16.msra.mxu0 0
        %1448 = vmatprep.subr.bf16.mxu0 0
        %1449 = vmatpush2.bf16.msra.mxu0 0
        %1450 = vmatprep.mubr.bf16.mxu0 0
        %1451 = vmatmul.mubr.bf16.gmra.mxu0 %v1416
        %v1452 = vpop.f32.mrf.mxu0
        %v1453 = vadd.f32 0.0, %v1452
        %v1454 = vpop.f32.mrf.mxu0
        %v1455 = vpop.f32.mrf.mxu0
        %v1456 = vpop.f32.mrf.mxu0
        %1457 = vdwg.mxu0
        %1459 = vrot.lane.b32.xlu0 %v1367, 32
        %v1460 = vpop.permute.xlu0 %1459
        %1463 = vrot.lane.b32.xlu0 %v1410, 64
        %v1464 = vpop.permute.xlu0 %1463
        %1467 = vrot.lane.b32.xlu0 %v1453, 96
        %v1468 = vpop.permute.xlu0 %1467
        %v1470 = vsel %vm1039, %v1324, %v1460
        %vm1471 = vcmask 523264
        %v1472 = vsel %vm1471, %v1470, %v1464
        %vm1473 = vcmask 785408
        %v1474 = vsel %vm1473, %v1472, %v1468
        %v1475 = vpack.c.bf16 %v1474, %v1474
        %v1476 = vld [vmem:[#allocation11] sm:$0xf]
        %v1477 = vld [vmem:[#allocation11 + $0x4] sm:$0xf]
        %v1478 = vld [vmem:[#allocation11 + $0x8] sm:$0xf]
        %v1479 = vld [vmem:[#allocation11 + $0xc] sm:$0xf]
        %v1480 = vld [vmem:[#allocation11 + $0x10] sm:$0xf]
        %v1481 = vld [vmem:[#allocation11 + $0x14] sm:$0xf]
        %v1482 = vld [vmem:[#allocation11 + $0x18] sm:$0xf]
        %v1483 = vld [vmem:[#allocation11 + $0x1c] sm:$0xf]
        %v1484 = vld [vmem:[#allocation11 + $0x20] sm:$0xf]
        %v1485 = vld [vmem:[#allocation11 + $0x24] sm:$0xf]
        %v1486 = vld [vmem:[#allocation11 + $0x28] sm:$0xf]
        %v1487 = vld [vmem:[#allocation11 + $0x2c] sm:$0xf]
        %v1488 = vld [vmem:[#allocation11 + $0x30] sm:$0xf]
        %v1489 = vld [vmem:[#allocation11 + $0x34] sm:$0xf]
        %v1490 = vld [vmem:[#allocation11 + $0x38] sm:$0xf]
        %v1491 = vld [vmem:[#allocation11 + $0x3c] sm:$0xf]
        %v1492 = vld [vmem:[%s6] sm:$0x1]
        %v1494 = vlaneseq
        %v1495 = vshrl.u32 %v1494, 7
        %v1496 = vsub.s32 0, %v1495
        %v1497 = vrot.slane %v1492, %v1496
        %v1515 = vunpack.c.l.b16 %v1476
        %v1516 = vunpack.c.l.b16 %v1477
        %v1517 = vunpack.c.l.b16 %v1478
        %v1518 = vunpack.c.l.b16 %v1479
        %v1519 = vunpack.c.l.b16 %v1480
        %v1520 = vunpack.c.l.b16 %v1481
        %v1521 = vunpack.c.l.b16 %v1482
        %v1522 = vunpack.c.l.b16 %v1483
        %v1523 = vunpack.c.l.b16 %v1484
        %v1524 = vunpack.c.l.b16 %v1485
        %v1525 = vunpack.c.l.b16 %v1486
        %v1526 = vunpack.c.l.b16 %v1487
        %v1527 = vunpack.c.l.b16 %v1488
        %v1528 = vunpack.c.l.b16 %v1489
        %v1529 = vunpack.c.l.b16 %v1490
        %v1530 = vunpack.c.l.b16 %v1491
        %v1531 = vpack.c.b16 %v1516, %v1515
        %v1532 = vpack.c.b16 %v1518, %v1517
        %v1533 = vpack.c.b16 %v1520, %v1519
        %v1534 = vpack.c.b16 %v1522, %v1521
        %v1535 = vpack.c.b16 %v1524, %v1523
        %v1536 = vpack.c.b16 %v1526, %v1525
        %v1537 = vpack.c.b16 %v1528, %v1527
        %v1538 = vpack.c.b16 %v1530, %v1529
        %1547 = vmatprep.subr.bf16.mxu0 0
        %1548 = vmatpush1.bf16.msra.mxu0 %v1538
        %1549 = vmatprep.subr.bf16.mxu0 0
        %1550 = vmatpush1.bf16.msra.mxu0 %v1537
        %1551 = vmatprep.subr.bf16.mxu0 0
        %1552 = vmatpush1.bf16.msra.mxu0 %v1536
        %1553 = vmatprep.subr.bf16.mxu0 0
        %1554 = vmatpush1.bf16.msra.mxu0 %v1535
        %1555 = vmatprep.subr.bf16.mxu0 0
        %1556 = vmatpush1.bf16.msra.mxu0 %v1534
        %1557 = vmatprep.subr.bf16.mxu0 0
        %1558 = vmatpush1.bf16.msra.mxu0 %v1533
        %1559 = vmatprep.subr.bf16.mxu0 0
        %1560 = vmatpush1.bf16.msra.mxu0 %v1532
        %1561 = vmatprep.subr.bf16.mxu0 0
        %1562 = vmatpush1.bf16.msra.mxu0 %v1531
        %1563 = vmatprep.subr.bf16.mxu0 0
        %1564 = vmatpush2.bf16.msra.mxu0 0
        %1565 = vmatprep.subr.bf16.mxu0 0
        %1566 = vmatpush2.bf16.msra.mxu0 0
        %1567 = vmatprep.subr.bf16.mxu0 0
        %1568 = vmatpush2.bf16.msra.mxu0 0
        %1569 = vmatprep.subr.bf16.mxu0 0
        %1570 = vmatpush2.bf16.msra.mxu0 0
        %1571 = vmatprep.subr.bf16.mxu0 0
        %1572 = vmatpush2.bf16.msra.mxu0 0
        %1573 = vmatprep.subr.bf16.mxu0 0
        %1574 = vmatpush2.bf16.msra.mxu0 0
        %1575 = vmatprep.subr.bf16.mxu0 0
        %1576 = vmatpush2.bf16.msra.mxu0 0
        %1577 = vmatprep.subr.bf16.mxu0 0
        %1578 = vmatpush2.bf16.msra.mxu0 0
        %1579 = vmatprep.mubr.bf16.mxu0 0
        %1580 = vmatmul.mubr.bf16.gmra.mxu0 %v1475
        %v1581 = vpop.f32.mrf.mxu0
        %v1582 = vadd.f32 %v1497, %v1581
        %v1583 = vpop.f32.mrf.mxu0
        %v1584 = vpop.f32.mrf.mxu0
        %v1585 = vpop.f32.mrf.mxu0
        %1586 = vdwg.mxu0
        %v1587 = vadd.f32 %v1582, %v656
        %1588 = vadd.xlane.f32.xlu0 %v1587
        %v1589 = vpop.xlane.xlu0 %1588
        %v1590 = vrcp.pop 128.0
        %v1591 = vmul.f32 %v1589, %v1590
        %v1592 = vsub.f32 %v1587, %v1591
        %v1593 = vmul.f32 %v1592, %v1592
        %1594 = vadd.xlane.f32.xlu0 %v1593
        %v1595 = vpop.xlane.xlu0 %1594
        %v1596 = vmul.f32 %v1595, %v1590
        %v1597 = vadd.f32 %v1596, 1e-05
        %v1598 = vrsqrt.pop %v1597
        %v1599 = vmul.f32 %v1592, %v1598
        %v1600 = vld [vmem:[%s7] sm:$0x1]
        %v1602 = vlaneseq
        %v1603 = vshrl.u32 %v1602, 7
        %v1604 = vsub.s32 0, %v1603
        %v1605 = vrot.slane %v1600, %v1604
        %v1607 = vmul.f32 %v1599, %v1605
        %v1608 = vld [vmem:[%s8] sm:$0x1]
        %v1610 = vlaneseq
        %v1611 = vshrl.u32 %v1610, 7
        %v1612 = vsub.s32 0, %v1611
        %v1613 = vrot.slane %v1608, %v1612
        %v1615 = vadd.f32 %v1607, %v1613
        %v1616 = vpack.c.bf16 %v1615, %v1615
        %v1617 = vld [vmem:[#allocation13] sm:$0xff]
        %v1618 = vld [vmem:[#allocation13 + $0x8] sm:$0xff]
        %v1619 = vld [vmem:[#allocation13 + $0x10] sm:$0xff]
        %v1620 = vld [vmem:[#allocation13 + $0x18] sm:$0xff]
        %v1621 = vld [vmem:[#allocation13 + $0x20] sm:$0xff]
        %v1622 = vld [vmem:[#allocation13 + $0x28] sm:$0xff]
        %v1623 = vld [vmem:[#allocation13 + $0x30] sm:$0xff]
        %v1624 = vld [vmem:[#allocation13 + $0x38] sm:$0xff]
        %v1625 = vld [vmem:[#allocation13 + $0x40] sm:$0xff]
        %v1626 = vld [vmem:[#allocation13 + $0x48] sm:$0xff]
        %v1627 = vld [vmem:[#allocation13 + $0x50] sm:$0xff]
        %v1628 = vld [vmem:[#allocation13 + $0x58] sm:$0xff]
        %v1629 = vld [vmem:[#allocation13 + $0x60] sm:$0xff]
        %v1630 = vld [vmem:[#allocation13 + $0x68] sm:$0xff]
        %v1631 = vld [vmem:[#allocation13 + $0x70] sm:$0xff]
        %v1632 = vld [vmem:[#allocation13 + $0x78] sm:$0xff]
        %v1633 = vld [vmem:[#allocation13 + $0x80] sm:$0xff]
        %v1634 = vld [vmem:[#allocation13 + $0x88] sm:$0xff]
        %v1635 = vld [vmem:[#allocation13 + $0x90] sm:$0xff]
        %v1636 = vld [vmem:[#allocation13 + $0x98] sm:$0xff]
        %v1637 = vld [vmem:[#allocation13 + $0xa0] sm:$0xff]
        %v1638 = vld [vmem:[#allocation13 + $0xa8] sm:$0xff]
        %v1639 = vld [vmem:[#allocation13 + $0xb0] sm:$0xff]
        %v1640 = vld [vmem:[#allocation13 + $0xb8] sm:$0xff]
        %v1641 = vld [vmem:[#allocation13 + $0xc0] sm:$0xff]
        %v1642 = vld [vmem:[#allocation13 + $0xc8] sm:$0xff]
        %v1643 = vld [vmem:[#allocation13 + $0xd0] sm:$0xff]
        %v1644 = vld [vmem:[#allocation13 + $0xd8] sm:$0xff]
        %v1645 = vld [vmem:[#allocation13 + $0xe0] sm:$0xff]
        %v1646 = vld [vmem:[#allocation13 + $0xe8] sm:$0xff]
        %v1647 = vld [vmem:[#allocation13 + $0xf0] sm:$0xff]
        %v1648 = vld [vmem:[#allocation13 + $0xf8] sm:$0xff]
        %v1649 = vld [vmem:[%s10] sm:$0xf]
        %v1651 = vlaneseq
        %v1652 = vshrl.u32 %v1651, 7
        %v1653 = vsub.s32 0, %v1652
        %v1654 = vrot.slane %v1649, %v1653
        %v1655 = vlaneseq
        %v1656 = vshrl.u32 %v1655, 7
        %v1657 = vsub.s32 1, %v1656
        %v1658 = vrot.slane %v1649, %v1657
        %v1659 = vlaneseq
        %v1660 = vshrl.u32 %v1659, 7
        %v1661 = vsub.s32 2, %v1660
        %v1662 = vrot.slane %v1649, %v1661
        %v1663 = vlaneseq
        %v1664 = vshrl.u32 %v1663, 7
        %v1665 = vsub.s32 3, %v1664
        %v1666 = vrot.slane %v1649, %v1665
        %v1703 = vunpack.c.l.b16 %v1617
        %v1704 = vunpack.c.h.b16 %v1617
        %v1705 = vunpack.c.l.b16 %v1618
        %v1706 = vunpack.c.h.b16 %v1618
        %v1707 = vunpack.c.l.b16 %v1619
        %v1708 = vunpack.c.h.b16 %v1619
        %v1709 = vunpack.c.l.b16 %v1620
        %v1710 = vunpack.c.h.b16 %v1620
        %v1711 = vunpack.c.l.b16 %v1621
        %v1712 = vunpack.c.h.b16 %v1621
        %v1713 = vunpack.c.l.b16 %v1622
        %v1714 = vunpack.c.h.b16 %v1622
        %v1715 = vunpack.c.l.b16 %v1623
        %v1716 = vunpack.c.h.b16 %v1623
        %v1717 = vunpack.c.l.b16 %v1624
        %v1718 = vunpack.c.h.b16 %v1624
        %v1719 = vunpack.c.l.b16 %v1625
        %v1720 = vunpack.c.h.b16 %v1625
        %v1721 = vunpack.c.l.b16 %v1626
        %v1722 = vunpack.c.h.b16 %v1626
        %v1723 = vunpack.c.l.b16 %v1627
        %v1724 = vunpack.c.h.b16 %v1627
        %v1725 = vunpack.c.l.b16 %v1628
        %v1726 = vunpack.c.h.b16 %v1628
        %v1727 = vunpack.c.l.b16 %v1629
        %v1728 = vunpack.c.h.b16 %v1629
        %v1729 = vunpack.c.l.b16 %v1630
        %v1730 = vunpack.c.h.b16 %v1630
        %v1731 = vunpack.c.l.b16 %v1631
        %v1732 = vunpack.c.h.b16 %v1631
        %v1733 = vunpack.c.l.b16 %v1632
        %v1734 = vunpack.c.h.b16 %v1632
        %v1735 = vunpack.c.l.b16 %v1633
        %v1736 = vunpack.c.h.b16 %v1633
        %v1737 = vunpack.c.l.b16 %v1634
        %v1738 = vunpack.c.h.b16 %v1634
        %v1739 = vunpack.c.l.b16 %v1635
        %v1740 = vunpack.c.h.b16 %v1635
        %v1741 = vunpack.c.l.b16 %v1636
        %v1742 = vunpack.c.h.b16 %v1636
        %v1743 = vunpack.c.l.b16 %v1637
        %v1744 = vunpack.c.h.b16 %v1637
        %v1745 = vunpack.c.l.b16 %v1638
        %v1746 = vunpack.c.h.b16 %v1638
        %v1747 = vunpack.c.l.b16 %v1639
        %v1748 = vunpack.c.h.b16 %v1639
        %v1749 = vunpack.c.l.b16 %v1640
        %v1750 = vunpack.c.h.b16 %v1640
        %v1751 = vunpack.c.l.b16 %v1641
        %v1752 = vunpack.c.h.b16 %v1641
        %v1753 = vunpack.c.l.b16 %v1642
        %v1754 = vunpack.c.h.b16 %v1642
        %v1755 = vunpack.c.l.b16 %v1643
        %v1756 = vunpack.c.h.b16 %v1643
        %v1757 = vunpack.c.l.b16 %v1644
        %v1758 = vunpack.c.h.b16 %v1644
        %v1759 = vunpack.c.l.b16 %v1645
        %v1760 = vunpack.c.h.b16 %v1645
        %v1761 = vunpack.c.l.b16 %v1646
        %v1762 = vunpack.c.h.b16 %v1646
        %v1763 = vunpack.c.l.b16 %v1647
        %v1764 = vunpack.c.h.b16 %v1647
        %v1765 = vunpack.c.l.b16 %v1648
        %v1766 = vunpack.c.h.b16 %v1648
        %v1767 = vpack.c.b16 %v1707, %v1703
        %v1768 = vpack.c.b16 %v1708, %v1704
        %v1769 = vpack.c.b16 %v1709, %v1705
        %v1770 = vpack.c.b16 %v1710, %v1706
        %v1771 = vpack.c.b16 %v1715, %v1711
        %v1772 = vpack.c.b16 %v1716, %v1712
        %v1773 = vpack.c.b16 %v1717, %v1713
        %v1774 = vpack.c.b16 %v1718, %v1714
        %v1775 = vpack.c.b16 %v1723, %v1719
        %v1776 = vpack.c.b16 %v1724, %v1720
        %v1777 = vpack.c.b16 %v1725, %v1721
        %v1778 = vpack.c.b16 %v1726, %v1722
        %v1779 = vpack.c.b16 %v1731, %v1727
        %v1780 = vpack.c.b16 %v1732, %v1728
        %v1781 = vpack.c.b16 %v1733, %v1729
        %v1782 = vpack.c.b16 %v1734, %v1730
        %v1783 = vpack.c.b16 %v1739, %v1735
        %v1784 = vpack.c.b16 %v1740, %v1736
        %v1785 = vpack.c.b16 %v1741, %v1737
        %v1786 = vpack.c.b16 %v1742, %v1738
        %v1787 = vpack.c.b16 %v1747, %v1743
        %v1788 = vpack.c.b16 %v1748, %v1744
        %v1789 = vpack.c.b16 %v1749, %v1745
        %v1790 = vpack.c.b16 %v1750, %v1746
        %v1791 = vpack.c.b16 %v1755, %v1751
        %v1792 = vpack.c.b16 %v1756, %v1752
        %v1793 = vpack.c.b16 %v1757, %v1753
        %v1794 = vpack.c.b16 %v1758, %v1754
        %v1795 = vpack.c.b16 %v1763, %v1759
        %v1796 = vpack.c.b16 %v1764, %v1760
        %v1797 = vpack.c.b16 %v1765, %v1761
        %v1798 = vpack.c.b16 %v1766, %v1762
        %1831 = vmatprep.subr.bf16.mxu0 %v1796
        %1832 = vmatpush1.bf16.msra.mxu0 %v1795
        %1833 = vmatprep.subr.bf16.mxu0 %v1792
        %1834 = vmatpush1.bf16.msra.mxu0 %v1791
        %1835 = vmatprep.subr.bf16.mxu0 %v1788
        %1836 = vmatpush1.bf16.msra.mxu0 %v1787
        %1837 = vmatprep.subr.bf16.mxu0 %v1784
        %1838 = vmatpush1.bf16.msra.mxu0 %v1783
        %1839 = vmatprep.subr.bf16.mxu0 %v1780
        %1840 = vmatpush1.bf16.msra.mxu0 %v1779
        %1841 = vmatprep.subr.bf16.mxu0 %v1776
        %1842 = vmatpush1.bf16.msra.mxu0 %v1775
        %1843 = vmatprep.subr.bf16.mxu0 %v1772
        %1844 = vmatpush1.bf16.msra.mxu0 %v1771
        %1845 = vmatprep.subr.bf16.mxu0 %v1768
        %1846 = vmatpush1.bf16.msra.mxu0 %v1767
        %1847 = vmatprep.subr.bf16.mxu0 0
        %1848 = vmatpush2.bf16.msra.mxu0 0
        %1849 = vmatprep.subr.bf16.mxu0 0
        %1850 = vmatpush2.bf16.msra.mxu0 0
        %1851 = vmatprep.subr.bf16.mxu0 0
        %1852 = vmatpush2.bf16.msra.mxu0 0
        %1853 = vmatprep.subr.bf16.mxu0 0
        %1854 = vmatpush2.bf16.msra.mxu0 0
        %1855 = vmatprep.subr.bf16.mxu0 0
        %1856 = vmatpush2.bf16.msra.mxu0 0
        %1857 = vmatprep.subr.bf16.mxu0 0
        %1858 = vmatpush2.bf16.msra.mxu0 0
        %1859 = vmatprep.subr.bf16.mxu0 0
        %1860 = vmatpush2.bf16.msra.mxu0 0
        %1861 = vmatprep.subr.bf16.mxu0 0
        %1862 = vmatpush2.bf16.msra.mxu0 0
        %1863 = vmatprep.mubr.bf16.mxu0 0
        %1864 = vmatmul.mubr.bf16.gmra.mxu0 %v1616
        %v1865 = vpop.f32.mrf.mxu0
        %v1866 = vadd.f32 %v1654, %v1865
        %v1867 = vpop.f32.mrf.mxu0
        %v1868 = vadd.f32 %v1658, %v1867
        %v1869 = vpop.f32.mrf.mxu0
        %v1870 = vpop.f32.mrf.mxu0
        %1871 = vdwg.mxu0
        %1872 = vmatprep.subr.bf16.mxu0 %v1798
        %1873 = vmatpush1.bf16.msra.mxu0 %v1797
        %1874 = vmatprep.subr.bf16.mxu0 %v1794
        %1875 = vmatpush1.bf16.msra.mxu0 %v1793
        %1876 = vmatprep.subr.bf16.mxu0 %v1790
        %1877 = vmatpush1.bf16.msra.mxu0 %v1789
        %1878 = vmatprep.subr.bf16.mxu0 %v1786
        %1879 = vmatpush1.bf16.msra.mxu0 %v1785
        %1880 = vmatprep.subr.bf16.mxu0 %v1782
        %1881 = vmatpush1.bf16.msra.mxu0 %v1781
        %1882 = vmatprep.subr.bf16.mxu0 %v1778
        %1883 = vmatpush1.bf16.msra.mxu0 %v1777
        %1884 = vmatprep.subr.bf16.mxu0 %v1774
        %1885 = vmatpush1.bf16.msra.mxu0 %v1773
        %1886 = vmatprep.subr.bf16.mxu0 %v1770
        %1887 = vmatpush1.bf16.msra.mxu0 %v1769
        %1888 = vmatprep.subr.bf16.mxu0 0
        %1889 = vmatpush2.bf16.msra.mxu0 0
        %1890 = vmatprep.subr.bf16.mxu0 0
        %1891 = vmatpush2.bf16.msra.mxu0 0
        %1892 = vmatprep.subr.bf16.mxu0 0
        %1893 = vmatpush2.bf16.msra.mxu0 0
        %1894 = vmatprep.subr.bf16.mxu0 0
        %1895 = vmatpush2.bf16.msra.mxu0 0
        %1896 = vmatprep.subr.bf16.mxu0 0
        %1897 = vmatpush2.bf16.msra.mxu0 0
        %1898 = vmatprep.subr.bf16.mxu0 0
        %1899 = vmatpush2.bf16.msra.mxu0 0
        %1900 = vmatprep.subr.bf16.mxu0 0
        %1901 = vmatpush2.bf16.msra.mxu0 0
        %1902 = vmatprep.subr.bf16.mxu0 0
        %1903 = vmatpush2.bf16.msra.mxu0 0
        %1904 = vmatprep.mubr.bf16.mxu0 0
        %1905 = vmatmul.mubr.bf16.gmra.mxu0 %v1616
        %v1906 = vpop.f32.mrf.mxu0
        %v1907 = vadd.f32 %v1662, %v1906
        %v1908 = vpop.f32.mrf.mxu0
        %v1909 = vadd.f32 %v1666, %v1908
        %v1910 = vpop.f32.mrf.mxu0
        %v1911 = vpop.f32.mrf.mxu0
        %1912 = vdwg.mxu0
        %v1913 = vmax.f32 %v1866, 0.0
        %v1914 = vmax.f32 %v1868, 0.0
        %v1915 = vmax.f32 %v1907, 0.0
        %v1916 = vmax.f32 %v1909, 0.0
        %v1917 = vpack.c.bf16 %v1913, %v1913
        %v1918 = vpack.c.bf16 %v1914, %v1914
        %v1919 = vpack.c.bf16 %v1915, %v1915
        %v1920 = vpack.c.bf16 %v1916, %v1916
        %v1921 = vld [vmem:[#allocation14] sm:$0xf]
        %v1922 = vld [vmem:[#allocation14 + $0x4] sm:$0xf]
        %v1923 = vld [vmem:[#allocation14 + $0x8] sm:$0xf]
        %v1924 = vld [vmem:[#allocation14 + $0xc] sm:$0xf]
        %v1925 = vld [vmem:[#allocation14 + $0x10] sm:$0xf]
        %v1926 = vld [vmem:[#allocation14 + $0x14] sm:$0xf]
        %v1927 = vld [vmem:[#allocation14 + $0x18] sm:$0xf]
        %v1928 = vld [vmem:[#allocation14 + $0x1c] sm:$0xf]
        %v1929 = vld [vmem:[#allocation14 + $0x20] sm:$0xf]
        %v1930 = vld [vmem:[#allocation14 + $0x24] sm:$0xf]
        %v1931 = vld [vmem:[#allocation14 + $0x28] sm:$0xf]
        %v1932 = vld [vmem:[#allocation14 + $0x2c] sm:$0xf]
        %v1933 = vld [vmem:[#allocation14 + $0x30] sm:$0xf]
        %v1934 = vld [vmem:[#allocation14 + $0x34] sm:$0xf]
        %v1935 = vld [vmem:[#allocation14 + $0x38] sm:$0xf]
        %v1936 = vld [vmem:[#allocation14 + $0x3c] sm:$0xf]
        %v1937 = vld [vmem:[#allocation14 + $0x40] sm:$0xf]
        %v1938 = vld [vmem:[#allocation14 + $0x44] sm:$0xf]
        %v1939 = vld [vmem:[#allocation14 + $0x48] sm:$0xf]
        %v1940 = vld [vmem:[#allocation14 + $0x4c] sm:$0xf]
        %v1941 = vld [vmem:[#allocation14 + $0x50] sm:$0xf]
        %v1942 = vld [vmem:[#allocation14 + $0x54] sm:$0xf]
        %v1943 = vld [vmem:[#allocation14 + $0x58] sm:$0xf]
        %v1944 = vld [vmem:[#allocation14 + $0x5c] sm:$0xf]
        %v1945 = vld [vmem:[#allocation14 + $0x60] sm:$0xf]
        %v1946 = vld [vmem:[#allocation14 + $0x64] sm:$0xf]
        %v1947 = vld [vmem:[#allocation14 + $0x68] sm:$0xf]
        %v1948 = vld [vmem:[#allocation14 + $0x6c] sm:$0xf]
        %v1949 = vld [vmem:[#allocation14 + $0x70] sm:$0xf]
        %v1950 = vld [vmem:[#allocation14 + $0x74] sm:$0xf]
        %v1951 = vld [vmem:[#allocation14 + $0x78] sm:$0xf]
        %v1952 = vld [vmem:[#allocation14 + $0x7c] sm:$0xf]
        %v1953 = vld [vmem:[#allocation14 + $0x80] sm:$0xf]
        %v1954 = vld [vmem:[#allocation14 + $0x84] sm:$0xf]
        %v1955 = vld [vmem:[#allocation14 + $0x88] sm:$0xf]
        %v1956 = vld [vmem:[#allocation14 + $0x8c] sm:$0xf]
        %v1957 = vld [vmem:[#allocation14 + $0x90] sm:$0xf]
        %v1958 = vld [vmem:[#allocation14 + $0x94] sm:$0xf]
        %v1959 = vld [vmem:[#allocation14 + $0x98] sm:$0xf]
        %v1960 = vld [vmem:[#allocation14 + $0x9c] sm:$0xf]
        %v1961 = vld [vmem:[#allocation14 + $0xa0] sm:$0xf]
        %v1962 = vld [vmem:[#allocation14 + $0xa4] sm:$0xf]
        %v1963 = vld [vmem:[#allocation14 + $0xa8] sm:$0xf]
        %v1964 = vld [vmem:[#allocation14 + $0xac] sm:$0xf]
        %v1965 = vld [vmem:[#allocation14 + $0xb0] sm:$0xf]
        %v1966 = vld [vmem:[#allocation14 + $0xb4] sm:$0xf]
        %v1967 = vld [vmem:[#allocation14 + $0xb8] sm:$0xf]
        %v1968 = vld [vmem:[#allocation14 + $0xbc] sm:$0xf]
        %v1969 = vld [vmem:[#allocation14 + $0xc0] sm:$0xf]
        %v1970 = vld [vmem:[#allocation14 + $0xc4] sm:$0xf]
        %v1971 = vld [vmem:[#allocation14 + $0xc8] sm:$0xf]
        %v1972 = vld [vmem:[#allocation14 + $0xcc] sm:$0xf]
        %v1973 = vld [vmem:[#allocation14 + $0xd0] sm:$0xf]
        %v1974 = vld [vmem:[#allocation14 + $0xd4] sm:$0xf]
        %v1975 = vld [vmem:[#allocation14 + $0xd8] sm:$0xf]
        %v1976 = vld [vmem:[#allocation14 + $0xdc] sm:$0xf]
        %v1977 = vld [vmem:[#allocation14 + $0xe0] sm:$0xf]
        %v1978 = vld [vmem:[#allocation14 + $0xe4] sm:$0xf]
        %v1979 = vld [vmem:[#allocation14 + $0xe8] sm:$0xf]
        %v1980 = vld [vmem:[#allocation14 + $0xec] sm:$0xf]
        %v1981 = vld [vmem:[#allocation14 + $0xf0] sm:$0xf]
        %v1982 = vld [vmem:[#allocation14 + $0xf4] sm:$0xf]
        %v1983 = vld [vmem:[#allocation14 + $0xf8] sm:$0xf]
        %v1984 = vld [vmem:[#allocation14 + $0xfc] sm:$0xf]
        %v1985 = vld [vmem:[%s12] sm:$0x1]
        %v1987 = vlaneseq
        %v1988 = vshrl.u32 %v1987, 7
        %v1989 = vsub.s32 0, %v1988
        %v1990 = vrot.slane %v1985, %v1989
        %v2056 = vunpack.c.l.b16 %v1921
        %v2057 = vunpack.c.l.b16 %v1922
        %v2058 = vunpack.c.l.b16 %v1923
        %v2059 = vunpack.c.l.b16 %v1924
        %v2060 = vunpack.c.l.b16 %v1925
        %v2061 = vunpack.c.l.b16 %v1926
        %v2062 = vunpack.c.l.b16 %v1927
        %v2063 = vunpack.c.l.b16 %v1928
        %v2064 = vunpack.c.l.b16 %v1929
        %v2065 = vunpack.c.l.b16 %v1930
        %v2066 = vunpack.c.l.b16 %v1931
        %v2067 = vunpack.c.l.b16 %v1932
        %v2068 = vunpack.c.l.b16 %v1933
        %v2069 = vunpack.c.l.b16 %v1934
        %v2070 = vunpack.c.l.b16 %v1935
        %v2071 = vunpack.c.l.b16 %v1936
        %v2072 = vunpack.c.l.b16 %v1937
        %v2073 = vunpack.c.l.b16 %v1938
        %v2074 = vunpack.c.l.b16 %v1939
        %v2075 = vunpack.c.l.b16 %v1940
        %v2076 = vunpack.c.l.b16 %v1941
        %v2077 = vunpack.c.l.b16 %v1942
        %v2078 = vunpack.c.l.b16 %v1943
        %v2079 = vunpack.c.l.b16 %v1944
        %v2080 = vunpack.c.l.b16 %v1945
        %v2081 = vunpack.c.l.b16 %v1946
        %v2082 = vunpack.c.l.b16 %v1947
        %v2083 = vunpack.c.l.b16 %v1948
        %v2084 = vunpack.c.l.b16 %v1949
        %v2085 = vunpack.c.l.b16 %v1950
        %v2086 = vunpack.c.l.b16 %v1951
        %v2087 = vunpack.c.l.b16 %v1952
        %v2088 = vunpack.c.l.b16 %v1953
        %v2089 = vunpack.c.l.b16 %v1954
        %v2090 = vunpack.c.l.b16 %v1955
        %v2091 = vunpack.c.l.b16 %v1956
        %v2092 = vunpack.c.l.b16 %v1957
        %v2093 = vunpack.c.l.b16 %v1958
        %v2094 = vunpack.c.l.b16 %v1959
        %v2095 = vunpack.c.l.b16 %v1960
        %v2096 = vunpack.c.l.b16 %v1961
        %v2097 = vunpack.c.l.b16 %v1962
        %v2098 = vunpack.c.l.b16 %v1963
        %v2099 = vunpack.c.l.b16 %v1964
        %v2100 = vunpack.c.l.b16 %v1965
        %v2101 = vunpack.c.l.b16 %v1966
        %v2102 = vunpack.c.l.b16 %v1967
        %v2103 = vunpack.c.l.b16 %v1968
        %v2104 = vunpack.c.l.b16 %v1969
        %v2105 = vunpack.c.l.b16 %v1970
        %v2106 = vunpack.c.l.b16 %v1971
        %v2107 = vunpack.c.l.b16 %v1972
        %v2108 = vunpack.c.l.b16 %v1973
        %v2109 = vunpack.c.l.b16 %v1974
        %v2110 = vunpack.c.l.b16 %v1975
        %v2111 = vunpack.c.l.b16 %v1976
        %v2112 = vunpack.c.l.b16 %v1977
        %v2113 = vunpack.c.l.b16 %v1978
        %v2114 = vunpack.c.l.b16 %v1979
        %v2115 = vunpack.c.l.b16 %v1980
        %v2116 = vunpack.c.l.b16 %v1981
        %v2117 = vunpack.c.l.b16 %v1982
        %v2118 = vunpack.c.l.b16 %v1983
        %v2119 = vunpack.c.l.b16 %v1984
        %v2120 = vpack.c.b16 %v2057, %v2056
        %v2121 = vpack.c.b16 %v2059, %v2058
        %v2122 = vpack.c.b16 %v2061, %v2060
        %v2123 = vpack.c.b16 %v2063, %v2062
        %v2124 = vpack.c.b16 %v2065, %v2064
        %v2125 = vpack.c.b16 %v2067, %v2066
        %v2126 = vpack.c.b16 %v2069, %v2068
        %v2127 = vpack.c.b16 %v2071, %v2070
        %v2128 = vpack.c.b16 %v2073, %v2072
        %v2129 = vpack.c.b16 %v2075, %v2074
        %v2130 = vpack.c.b16 %v2077, %v2076
        %v2131 = vpack.c.b16 %v2079, %v2078
        %v2132 = vpack.c.b16 %v2081, %v2080
        %v2133 = vpack.c.b16 %v2083, %v2082
        %v2134 = vpack.c.b16 %v2085, %v2084
        %v2135 = vpack.c.b16 %v2087, %v2086
        %v2136 = vpack.c.b16 %v2089, %v2088
        %v2137 = vpack.c.b16 %v2091, %v2090
        %v2138 = vpack.c.b16 %v2093, %v2092
        %v2139 = vpack.c.b16 %v2095, %v2094
        %v2140 = vpack.c.b16 %v2097, %v2096
        %v2141 = vpack.c.b16 %v2099, %v2098
        %v2142 = vpack.c.b16 %v2101, %v2100
        %v2143 = vpack.c.b16 %v2103, %v2102
        %v2144 = vpack.c.b16 %v2105, %v2104
        %v2145 = vpack.c.b16 %v2107, %v2106
        %v2146 = vpack.c.b16 %v2109, %v2108
        %v2147 = vpack.c.b16 %v2111, %v2110
        %v2148 = vpack.c.b16 %v2113, %v2112
        %v2149 = vpack.c.b16 %v2115, %v2114
        %v2150 = vpack.c.b16 %v2117, %v2116
        %v2151 = vpack.c.b16 %v2119, %v2118
        %2184 = vmatprep.subr.bf16.mxu0 0
        %2185 = vmatpush1.bf16.msra.mxu0 %v2127
        %2186 = vmatprep.subr.bf16.mxu0 0
        %2187 = vmatpush1.bf16.msra.mxu0 %v2126
        %2188 = vmatprep.subr.bf16.mxu0 0
        %2189 = vmatpush1.bf16.msra.mxu0 %v2125
        %2190 = vmatprep.subr.bf16.mxu0 0
        %2191 = vmatpush1.bf16.msra.mxu0 %v2124
        %2192 = vmatprep.subr.bf16.mxu0 0
        %2193 = vmatpush1.bf16.msra.mxu0 %v2123
        %2194 = vmatprep.subr.bf16.mxu0 0
        %2195 = vmatpush1.bf16.msra.mxu0 %v2122
        %2196 = vmatprep.subr.bf16.mxu0 0
        %2197 = vmatpush1.bf16.msra.mxu0 %v2121
        %2198 = vmatprep.subr.bf16.mxu0 0
        %2199 = vmatpush1.bf16.msra.mxu0 %v2120
        %2200 = vmatprep.subr.bf16.mxu0 0
        %2201 = vmatpush2.bf16.msra.mxu0 %v2135
        %2202 = vmatprep.subr.bf16.mxu0 0
        %2203 = vmatpush2.bf16.msra.mxu0 %v2134
        %2204 = vmatprep.subr.bf16.mxu0 0
        %2205 = vmatpush2.bf16.msra.mxu0 %v2133
        %2206 = vmatprep.subr.bf16.mxu0 0
        %2207 = vmatpush2.bf16.msra.mxu0 %v2132
        %2208 = vmatprep.subr.bf16.mxu0 0
        %2209 = vmatpush2.bf16.msra.mxu0 %v2131
        %2210 = vmatprep.subr.bf16.mxu0 0
        %2211 = vmatpush2.bf16.msra.mxu0 %v2130
        %2212 = vmatprep.subr.bf16.mxu0 0
        %2213 = vmatpush2.bf16.msra.mxu0 %v2129
        %2214 = vmatprep.subr.bf16.mxu0 0
        %2215 = vmatpush2.bf16.msra.mxu0 %v2128
        %2216 = vmatprep.mubr.bf16.mxu0 %v1918
        %2217 = vmatmul.mubr.bf16.gmra.mxu0 %v1917
        %v2218 = vpop.f32.mrf.mxu0
        %v2219 = vadd.f32 %v1990, %v2218
        %v2220 = vpop.f32.mrf.mxu0
        %v2221 = vpop.f32.mrf.mxu0
        %v2222 = vpop.f32.mrf.mxu0
        %2223 = vdwg.mxu0
        %2224 = vmatprep.subr.bf16.mxu0 0
        %2225 = vmatpush1.bf16.msra.mxu0 %v2143
        %2226 = vmatprep.subr.bf16.mxu0 0
        %2227 = vmatpush1.bf16.msra.mxu0 %v2142
        %2228 = vmatprep.subr.bf16.mxu0 0
        %2229 = vmatpush1.bf16.msra.mxu0 %v2141
        %2230 = vmatprep.subr.bf16.mxu0 0
        %2231 = vmatpush1.bf16.msra.mxu0 %v2140
        %2232 = vmatprep.subr.bf16.mxu0 0
        %2233 = vmatpush1.bf16.msra.mxu0 %v2139
        %2234 = vmatprep.subr.bf16.mxu0 0
        %2235 = vmatpush1.bf16.msra.mxu0 %v2138
        %2236 = vmatprep.subr.bf16.mxu0 0
        %2237 = vmatpush1.bf16.msra.mxu0 %v2137
        %2238 = vmatprep.subr.bf16.mxu0 0
        %2239 = vmatpush1.bf16.msra.mxu0 %v2136
        %2240 = vmatprep.subr.bf16.mxu0 0
        %2241 = vmatpush2.bf16.msra.mxu0 %v2151
        %2242 = vmatprep.subr.bf16.mxu0 0
        %2243 = vmatpush2.bf16.msra.mxu0 %v2150
        %2244 = vmatprep.subr.bf16.mxu0 0
        %2245 = vmatpush2.bf16.msra.mxu0 %v2149
        %2246 = vmatprep.subr.bf16.mxu0 0
        %2247 = vmatpush2.bf16.msra.mxu0 %v2148
        %2248 = vmatprep.subr.bf16.mxu0 0
        %2249 = vmatpush2.bf16.msra.mxu0 %v2147
        %2250 = vmatprep.subr.bf16.mxu0 0
        %2251 = vmatpush2.bf16.msra.mxu0 %v2146
        %2252 = vmatprep.subr.bf16.mxu0 0
        %2253 = vmatpush2.bf16.msra.mxu0 %v2145
        %2254 = vmatprep.subr.bf16.mxu0 0
        %2255 = vmatpush2.bf16.msra.mxu0 %v2144
        %2256 = vmatprep.mubr.bf16.mxu0 %v1920
        %2257 = vmatmul.mubr.bf16.gmra.mxu0 %v1919
        %v2258 = vpop.f32.mrf.mxu0
        %v2259 = vadd.f32 %v2219, %v2258
        %v2260 = vpop.f32.mrf.mxu0
        %v2261 = vpop.f32.mrf.mxu0
        %v2262 = vpop.f32.mrf.mxu0
        %2263 = vdwg.mxu0
        %v2264 = vadd.f32 %v2259, %v1615
        %2265 = vadd.xlane.f32.xlu0 %v2264
        %v2266 = vpop.xlane.xlu0 %2265
        %v2267 = vmul.f32 %v2266, %v1590
        %v2268 = vsub.f32 %v2264, %v2267
        %v2269 = vmul.f32 %v2268, %v2268
        %2270 = vadd.xlane.f32.xlu0 %v2269
        %v2271 = vpop.xlane.xlu0 %2270
        %v2272 = vmul.f32 %v2271, %v1590
        %v2273 = vadd.f32 %v2272, 1e-05
        %v2274 = vrsqrt.pop %v2273
        %v2275 = vmul.f32 %v2268, %v2274
        %v2276 = vld [vmem:[%s13] sm:$0x1]
        %v2278 = vlaneseq
        %v2279 = vshrl.u32 %v2278, 7
        %v2280 = vsub.s32 0, %v2279
        %v2281 = vrot.slane %v2276, %v2280
        %v2283 = vmul.f32 %v2275, %v2281
        %v2284 = vld [vmem:[%s14] sm:$0x1]
        %v2286 = vlaneseq
        %v2287 = vshrl.u32 %v2286, 7
        %v2288 = vsub.s32 0, %v2287
        %v2289 = vrot.slane %v2284, %v2288
        %v2291 = vadd.f32 %v2283, %v2289
        %2292 = vst [vmem:[%s654] sm:$0xff] %v2291
        %s2293 = sand.u32 %s387, 1
        %s2294 = scalar_lea.sflag [#allocation4], %s2293
        %s2295 = sand.u32 %s387, 1
        %s2296 = smul.addr %s2295, 8
        %s2297 = scalar_lea.vmem [#allocation16], %s2296
        // Predicated region
        $region113: #{tpu_custom_call.1} parent=79 // pred_check
          %p2298 = pneg %p397
        $region114: #{tpu_custom_call.1} parent=79 // pred_check_branch
          %2300 = sbr.rel (%p2298) target = $region116
        $region115: #{tpu_custom_call.1} parent=79 // pred_region
          %s2302 = ssub.s32 128, 128
          %2303 = vsyncadd %s2294, %s2302
          %s2304 = smul.addr %s42, 2
          %s2305 = sadd.s32 %s43, %s2304
          %s2306 = smul.addr %s2305, 128
          %s2307 = scalar_lea.hbm %s15, %s2306
          %s2309 = sshll.u32 %s2297, 4
          %s2310 = int_to_ptr.vmem [resolvable:$true] %s2309
          %2312 = dma.vmem_to_hbm [thread:$0]  %s2310, 128, %s2307, %s2294
        $region116: #{tpu_custom_call.1} parent=79 // pred_fallthru
          _
      $region80: #{tpu_custom_call.1} parent=5 // pred_fallthru
        _
      %p2313 = scmp.le.s32.totalorder 2, %s33
      // Predicated region
      $region117: #{tpu_custom_call.1} parent=5 // pred_check
        %p2314 = pneg %p2313
      $region118: #{tpu_custom_call.1} parent=5 // pred_check_branch
        %2316 = sbr.rel (%p2314) target = $region120
      $region119: #{tpu_custom_call.1} parent=5 // pred_region
        %s2317 = ssub.s32 %s33, 2
        // Predicated region
        $region121: #{tpu_custom_call.1} parent=119 // pred_check
          %p2318 = pneg %p403
        $region122: #{tpu_custom_call.1} parent=119 // pred_check_branch
          %2320 = sbr.rel (%p2318) target = $region124
        $region123: #{tpu_custom_call.1} parent=119 // pred_region
          %s2321 = sand.u32 %s388, 1
          %s2322 = scalar_lea.sflag [#allocation4], %s2321
          %s2323 = sand.u32 %s388, 1
          %s2324 = smul.addr %s2323, 8
          %s2325 = scalar_lea.vmem [#allocation16], %s2324
          %2326 = dma.done %s2322, 128
        $region124: #{tpu_custom_call.1} parent=119 // pred_fallthru
          _
      $region120: #{tpu_custom_call.1} parent=5 // pred_fallthru
        _
    $region6: #{tpu_custom_call.1} parent=1 // loop_footer
      %s37 = sadd.s32 1, %s33
    $region7: #{tpu_custom_call.1} parent=1 // loop_footer_branch
      %32 = sbr.rel target = $region3
    $region8: #{tpu_custom_call.1} parent=1 // loop_exit
      _
    %2327 = vsyncpa [#allocation3], 1
    %s2328 = scalar_lea.sflag [#allocation3], 1
    %2329 = vsyncpa %s2328, 1
    %2330 = vsyncpa [#allocation6], 1
    %s2331 = scalar_lea.sflag [#allocation6], 1
    %2332 = vsyncpa %s2331, 1
    %2333 = vsyncpa [#allocation9], 1
    %2334 = vsyncpa [#allocation12], 1
    %2335 = vsyncpa [#allocation15], 1
    %2336 = vsyncpa [#allocation4], 1
    %s2337 = scalar_lea.sflag [#allocation4], 1
    %2338 = vsyncpa %s2337, 1

</llo_original>
